<compile_context>
chip_gen: v7x
topology: tpu7x:2x2x1
jax: 0.10.0
libtpu: 0.0.40
codegen_flags: <defaults>
</compile_context>

<pallas_src>
import functools

import jax
import jax.numpy as jnp
from jax import lax
from jax.experimental import pallas as pl
from jax.experimental.pallas import tpu as pltpu


TN = 1024  # output-channel tile (lane-dense, multiple of 128); grid = Cout // TN


def relu_matmul_kernel(x_ref, w_ref, o_ref):
    # x_ref: (Mpad, Cin) bf16, w_ref: (TN, Cin) bf16, o_ref: (Mpad, TN) f32
    x = jnp.maximum(x_ref[...], 0)                      # fused ReLU (VPU, exact in bf16)
    # Contract Cin of x against Cin of w (weight kept in native (Cout, Cin)
    # layout -> no transpose in the wrapper). f32 accumulation on the MXU.
    o_ref[...] = lax.dot_general(
        x, w_ref[...],
        dimension_numbers=(((1,), (1,)), ((), ())),
        preferred_element_type=jnp.float32,
    )


def prepare_weight(weight_oi_f32):
    """One-time weight prep (outside the hot path): bf16 cast, layout unchanged."""
    return weight_oi_f32.astype(jnp.bfloat16)


@jax.jit
def relu_conv1x1(x_nchw, w_bf16_oi):
    """x_nchw: (N, Cin, H, W) f32.  w_bf16_oi: (Cout, Cin) bf16 (1x1 conv kernel)."""
    N, Cin, H, W = x_nchw.shape
    Cout = w_bf16_oi.shape[0]

    M = N * H * W
    Mpad = ((M + 7) // 8) * 8  # sublane-align rows

    # NCHW -> NHWC -> (M, Cin); pad rows; cast activations to bf16.
    x_rows = jnp.transpose(x_nchw, (0, 2, 3, 1)).reshape(M, Cin)
    x_rows = jnp.pad(x_rows, ((0, Mpad - M), (0, 0))).astype(jnp.bfloat16)

    tn = min(TN, Cout)
    assert Cout % tn == 0
    grid = (Cout // tn,)

    cost = pl.CostEstimate(
        flops=2 * Mpad * Cin * Cout,
        transcendentals=0,
        bytes_accessed=Mpad * Cin * 2 + Cout * Cin * 2 + Mpad * Cout * 4,
    )

    out_rows = pl.pallas_call(
        relu_matmul_kernel,
        out_shape=jax.ShapeDtypeStruct((Mpad, Cout), jnp.float32),
        grid_spec=pltpu.PrefetchScalarGridSpec(
            num_scalar_prefetch=0,
            grid=grid,
            in_specs=[
                pl.BlockSpec((Mpad, Cin), lambda j: (0, 0)),   # x resident across grid
                pl.BlockSpec((tn, Cin), lambda j: (j, 0)),     # weight tile, native layout
            ],
            out_specs=pl.BlockSpec((Mpad, tn), lambda j: (0, j)),
        ),
        compiler_params=pltpu.CompilerParams(
            dimension_semantics=("parallel",)),   # v7x: each TC takes one W half
        cost_estimate=cost,
    )(x_rows, w_bf16_oi)

    out_rows = out_rows[:M]  # drop row padding
    # (M, Cout) -> NHWC -> NCHW
    # TODO(synk): if the consumer can take NHWC, skip this final transpose.
    return out_rows.reshape(N, H, W, Cout).transpose(0, 3, 1, 2)


if __name__ == "__main__":
    key = jax.random.PRNGKey(0)
    k_x, k_w = jax.random.split(key)

    # Shapes implied by the module: input [1, 512, 7, 7], conv 512 -> 2048 (1x1).
    N, Cin, H, W = 1, 512, 7, 7
    Cout = 2048

    x = jax.random.normal(k_x, (N, Cin, H, W), dtype=jnp.float32)
    # PyTorch Conv2d weight is (Cout, Cin, 1, 1); we use the squeezed (Cout, Cin) form.
    weight = jax.random.normal(k_w, (Cout, Cin), dtype=jnp.float32) * 0.02

    w_bf16 = prepare_weight(weight)  # one-time, outside the hot path

    out = relu_conv1x1(x, w_bf16)
    out = jax.block_until_ready(out)

    # Reference check in plain JAX (f32). bf16 operands -> loosened tolerance;
    # accumulation in the kernel stays f32 so error is bounded.
    ref = jnp.einsum("nchw,oc->nohw", jnp.maximum(x, 0.0), weight)
    assert out.shape == (N, Cout, H, W), out.shape
    max_err = float(jnp.max(jnp.abs(out - ref)))
    assert jnp.allclose(out, ref, atol=2e-2, rtol=2e-2), max_err

    print("KERNEL_OK")
</pallas_src>

<mosaic_0001>
module attributes {stable_mosaic.version = 11 : i64} {
  func.func @relu_matmul_kernel(%arg0: i32, %arg1: memref<56x512xbf16, #tpu.memory_space<vmem>>, %arg2: memref<1024x512xbf16, #tpu.memory_space<vmem>>, %arg3: memref<56x1024xf32, #tpu.memory_space<vmem>>) attributes {dimension_semantics = [#tpu.dimension_semantics<parallel>], iteration_bounds = array<i64: 2>, scalar_prefetch = 0 : i64, scratch_operands = 0 : i64, tpu.core_type = #tpu.core_type<tc>, window_params = [{pipeline_mode = #tpu.pipeline_mode<synchronous>, transform_indices = @transform_0, window_bounds = array<i64: 56, 512>}, {transform_indices = @transform_1, window_bounds = array<i64: 1024, 512>}, {transform_indices = @transform_2, window_bounds = array<i64: 56, 1024>}]} {
    %c0 = arith.constant 0 : index
    %c0_0 = arith.constant 0 : index
    %0 = vector.load %arg1[%c0, %c0_0] : memref<56x512xbf16, #tpu.memory_space<vmem>>, vector<56x512xbf16>
    %cst = arith.constant 0.000000e+00 : bf16
    %1 = vector.broadcast %cst : bf16 to vector<56x512xbf16>
    %2 = arith.maximumf %0, %1 : vector<56x512xbf16>
    %c0_1 = arith.constant 0 : index
    %c0_2 = arith.constant 0 : index
    %3 = vector.load %arg2[%c0_1, %c0_2] : memref<1024x512xbf16, #tpu.memory_space<vmem>>, vector<1024x512xbf16>
    %cst_3 = arith.constant dense<0.000000e+00> : vector<56x1024xf32>
    %4 = tpu.matmul %2, %3, %cst_3 {dimension_numbers = #tpu.dot_dimension_numbers<[1], [1], [0], [0], [0, 0, 1, 0], [], []>} : vector<56x512xbf16>, vector<1024x512xbf16>, vector<56x1024xf32> -> vector<56x1024xf32>
    %c0_4 = arith.constant 0 : index
    %c0_5 = arith.constant 0 : index
    %5 = vector.load %arg3[%c0_4, %c0_5] : memref<56x1024xf32, #tpu.memory_space<vmem>>, vector<56x1024xf32>
    tpu.vector_store %arg3[%c0_4, %c0_5], %4 {strides = array<i32>} : memref<56x1024xf32, #tpu.memory_space<vmem>>, vector<56x1024xf32>,
    return
  }
  func.func @transform_0(%arg0: i32) -> (i32, i32) {
    %c0_i32 = arith.constant 0 : i32
    %c0_i32_0 = arith.constant 0 : i32
    %c0_i32_1 = arith.constant 0 : i32
    return %c0_i32, %c0_i32_0 : i32, i32
  }
  func.func @transform_1(%arg0: i32) -> (i32, i32) {
    %c0_i32 = arith.constant 0 : i32
    %c0_i32_0 = arith.constant 0 : i32
    return %arg0, %c0_i32 : i32, i32
  }
  func.func @transform_2(%arg0: i32) -> (i32, i32) {
    %c0_i32 = arith.constant 0 : i32
    %c0_i32_0 = arith.constant 0 : i32
    return %c0_i32, %arg0 : i32, i32
  }
}

</mosaic_0001>

<llo_original>
// kernel: relu_conv1x1.1
$region0: #{relu_conv1x1.1}
  #allocation0 [shape = 'u32[]', space=smem, size = 0x4, offset = 0x4, fixed_abs, tag = 'smem constant byte address 0x4 - core index']
  #allocation1 [shape = 'u32[144,128]{1,0:T(1,128)}', space=vmem, size = 0x12000, scoped, tag = 'internal scratch']
  %s0 = inlined_call_operand.vmem [shape: bf16[56,512], index: 0, kind: input, shape index: {}]
  %s1 = inlined_call_operand.hbm [shape: bf16[2048,512], index: 1, kind: input, shape index: {}]
  %s2 = inlined_call_operand.vmem [shape: f32[56,2048], index: 2, kind: output, shape index: {}]
  %s3 = sld [smem:[#allocation0]]
  $region64: #{relu_conv1x1.1} parent=0
    _
  %s5 = ssub.s32 1, %s3
  %s6 = scalar_select 0, %s5, %s3
  $region1: #{relu_conv1x1.1} parent=0
    #allocation2 [shape = 'u8[2097152]{0}', space=vmem, size = 0x200000, scoped, tag = 'input window, operand 1']
    #allocation3 [shape = 's32[2]{0}', space=sflag, size = 0x8, scoped, tag = 'scoped memory for relu_conv1x1.1']
    #allocation4 [shape = 'u8[458752]{0}', space=vmem, size = 0x70000, scoped, tag = 'output window, operand 0']
    %7 = vsyncpa [#allocation3], 0
    %s8 = scalar_lea.sflag [#allocation3], 1
    %9 = vsyncpa %s8, 0
    loop: start=0, step=1, limit=4
    $region2: #{relu_conv1x1.1} parent=1 // loop_pre_header
      _
    $region3: #{relu_conv1x1.1} parent=1 // loop_header
      %s11 = sphi 0, %s15
      %p12 = scmp.ge.s32.totalorder %s11, 4
      %s19 = sphi 0, %s19
      %s21 = sphi 0, %s19
      %s22 = sphi 0, %s21
      %s36 = sphi 0, %s22
      %s42 = sphi 0, %s44
      %s45 = sphi 0, %s42
      %s46 = sphi 0, %s45
      %s62 = sphi 0, %s46
      %s68 = sphi 0, %s70
      %s71 = sphi 0, %s68
      %s72 = sphi 0, %s71
      %s88 = sphi 0, %s72
    $region4: #{relu_conv1x1.1} parent=1 // loop_header_branch
      %14 = sbr.rel (%p12) target = $region8
    $region5: #{relu_conv1x1.1} parent=1 // loop_body
      %s16 = ssub.s32 %s11, 1
      %s17 = ssub.s32 %s11, 2
      %s18 = sadd.s32 %s11, 1
      %s20 = sadd.s32 %s19, 1
      %p23 = scmp.eq.s32.totalorder %s11, 1
      %p24 = scmp.ne.s32.totalorder %s19, %s21
      %p25 = scmp.eq.s32.totalorder %s11, 0
      %p26 = por %p24, %p25
      %p27 = scmp.ne.s32.totalorder %s19, %s21
      %p28 = scmp.eq.s32.totalorder %s16, 1
      %p29 = por %p27, %p28
      %p30 = scmp.ne.s32.totalorder %s21, %s22
      %p31 = scmp.eq.s32.totalorder %s16, 0
      %p32 = por %p30, %p31
      %p33 = scmp.ne.s32.totalorder %s21, %s22
      %p34 = scmp.eq.s32.totalorder %s17, 1
      %p35 = por %p33, %p34
      %p37 = scmp.ne.s32.totalorder %s22, %s36
      %p38 = scmp.eq.s32.totalorder %s17, 0
      %p39 = por %p37, %p38
      %s40 = ssub.s32 %s11, %s18
      %p41 = scmp.eq.s32.totalorder %s40, 0
      %s43 = sadd.s32 %s42, 1
      %s44 = scalar_select %p41, %s42, %s43
      %p47 = pneg %p41
      %p48 = scmp.eq.s32.totalorder %s11, 1
      %p49 = por %p47, %p48
      %p50 = scmp.ne.s32.totalorder %s42, %s45
      %p51 = scmp.eq.s32.totalorder %s11, 0
      %p52 = por %p50, %p51
      %p53 = scmp.ne.s32.totalorder %s42, %s45
      %p54 = scmp.eq.s32.totalorder %s16, 1
      %p55 = por %p53, %p54
      %p56 = scmp.ne.s32.totalorder %s45, %s46
      %p57 = scmp.eq.s32.totalorder %s16, 0
      %p58 = por %p56, %p57
      %p59 = scmp.ne.s32.totalorder %s45, %s46
      %p60 = scmp.eq.s32.totalorder %s17, 1
      %p61 = por %p59, %p60
      %p63 = scmp.ne.s32.totalorder %s46, %s62
      %p64 = scmp.eq.s32.totalorder %s17, 0
      %p65 = por %p63, %p64
      %s66 = ssub.s32 %s11, %s18
      %p67 = scmp.eq.s32.totalorder %s66, 0
      %s69 = sadd.s32 %s68, 1
      %s70 = scalar_select %p67, %s68, %s69
      %p73 = pneg %p67
      %p74 = scmp.eq.s32.totalorder %s11, 1
      %p75 = por %p73, %p74
      %p76 = scmp.ne.s32.totalorder %s68, %s71
      %p77 = scmp.eq.s32.totalorder %s11, 0
      %p78 = por %p76, %p77
      %p79 = scmp.ne.s32.totalorder %s68, %s71
      %p80 = scmp.eq.s32.totalorder %s16, 1
      %p81 = por %p79, %p80
      %p82 = scmp.ne.s32.totalorder %s71, %s72
      %p83 = scmp.eq.s32.totalorder %s16, 0
      %p84 = por %p82, %p83
      %p85 = scmp.ne.s32.totalorder %s71, %s72
      %p86 = scmp.eq.s32.totalorder %s17, 1
      %p87 = por %p85, %p86
      %p89 = scmp.ne.s32.totalorder %s72, %s88
      %p90 = scmp.eq.s32.totalorder %s17, 0
      %p91 = por %p89, %p90
      %p92 = scmp.le.s32.totalorder 1, %s11
      %p93 = scmp.lt.s32.totalorder %s11, 3
      %p94 = pnand %p92, %p93
      %p95 = pneg %p94
      // Predicated region
      $region9: #{relu_conv1x1.1} parent=5 // pred_check
        _
      $region10: #{relu_conv1x1.1} parent=5 // pred_check_branch
        %97 = sbr.rel (%p94) target = $region12
      $region11: #{relu_conv1x1.1} parent=5 // pred_region
        %s98 = ssub.s32 %s11, 1
        // Predicated region
        $region13: #{relu_conv1x1.1} parent=11 // pred_check
          %p99 = pneg %p32
        $region14: #{relu_conv1x1.1} parent=11 // pred_check_branch
          %101 = sbr.rel (%p99) target = $region16
        $region15: #{relu_conv1x1.1} parent=11 // pred_region
          _
        $region16: #{relu_conv1x1.1} parent=11 // pred_fallthru
          _
      $region12: #{relu_conv1x1.1} parent=5 // pred_fallthru
        _
      %p102 = scmp.lt.s32.totalorder %s11, 2
      // Predicated region
      $region17: #{relu_conv1x1.1} parent=5 // pred_check
        %p103 = pneg %p102
      $region18: #{relu_conv1x1.1} parent=5 // pred_check_branch
        %105 = sbr.rel (%p103) target = $region20
      $region19: #{relu_conv1x1.1} parent=5 // pred_region
        // Predicated region
        $region21: #{relu_conv1x1.1} parent=19 // pred_check
          %p106 = pneg %p52
        $region22: #{relu_conv1x1.1} parent=19 // pred_check_branch
          %108 = sbr.rel (%p106) target = $region24
        $region23: #{relu_conv1x1.1} parent=19 // pred_region
          %s109 = sand.u32 %s42, 1
          %s110 = scalar_lea.sflag [#allocation3], %s109
          %s111 = sand.u32 %s42, 1
          %s112 = smul.addr %s111, 2048
          %s113 = scalar_lea.vmem [#allocation2], %s112
          %s114 = smul.u32 128, %s11
          %s116 = ssub.s32 32768, 32768
          %117 = vsyncadd %s110, %s116
          %s118 = smul.addr %s114, 4
          %s119 = smul.addr %s118, 64
          %s120 = scalar_lea.hbm %s1, %s119
          %s121 = sshll.u32 %s113, 4
          %s122 = int_to_ptr.vmem [resolvable:$true] %s121
          %127 = dma.hbm_to_vmem [thread:$0]  %s120, 32768, %s122, %s110, 256, 256, 16
        $region24: #{relu_conv1x1.1} parent=19 // pred_fallthru
          _
      $region20: #{relu_conv1x1.1} parent=5 // pred_fallthru
        _
      %p128 = scmp.le.s32.totalorder 1, %s11
      %p129 = scmp.lt.s32.totalorder %s11, 3
      %p130 = pnand %p128, %p129
      %p131 = pneg %p130
      // Predicated region
      $region25: #{relu_conv1x1.1} parent=5 // pred_check
        _
      $region26: #{relu_conv1x1.1} parent=5 // pred_check_branch
        %133 = sbr.rel (%p130) target = $region28
      $region27: #{relu_conv1x1.1} parent=5 // pred_region
        %s134 = ssub.s32 %s11, 1
        %s135 = sand.u32 %s45, 1
        %s136 = scalar_lea.sflag [#allocation3], %s135
        %s137 = sand.u32 %s45, 1
        %s138 = smul.addr %s137, 2048
        %s139 = scalar_lea.vmem [#allocation2], %s138
        // Predicated region
        $region29: #{relu_conv1x1.1} parent=27 // pred_check
          %p140 = pneg %p58
        $region30: #{relu_conv1x1.1} parent=27 // pred_check_branch
          %142 = sbr.rel (%p140) target = $region32
        $region31: #{relu_conv1x1.1} parent=27 // pred_region
          %143 = dma.done %s136, 32768
        $region32: #{relu_conv1x1.1} parent=27 // pred_fallthru
          _
        %p144 = pneg %p32
        %p145 = pneg %p29
        %s146 = sand.u32 %s45, 1
        %s147 = scalar_lea.sflag [#allocation3], %s146
        %s148 = sand.u32 %s45, 1
        %s149 = smul.addr %s148, 2048
        %s150 = scalar_lea.vmem [#allocation2], %s149
        %p151 = pneg %p58
        %p152 = pneg %p55
        %p153 = pneg %p84
        %p154 = pneg %p81
        %s155 = sand.u32 %s71, 1
        %s156 = sand.u32 %s71, 1
        %s157 = smul.addr %s156, 448
        %s158 = scalar_lea.vmem [#allocation4], %s157
        %s159 = smul.u32 128, %s16
        %s160 = smul.u32 8, %s16
        %v162 = vld [vmem:[%s0] sm:$0xff]
        %v163 = vld [vmem:[%s0 + $0x8] sm:$0xff]
        %v164 = vld [vmem:[%s0 + $0x10] sm:$0xff]
        %v165 = vld [vmem:[%s0 + $0x18] sm:$0xff]
        %v166 = vld [vmem:[%s0 + $0x20] sm:$0xff]
        %v167 = vld [vmem:[%s0 + $0x28] sm:$0xff]
        %v168 = vld [vmem:[%s0 + $0x30] sm:$0xff]
        %v169 = vld [vmem:[%s0 + $0x38] sm:$0xff]
        %v170 = vld [vmem:[%s0 + $0x40] sm:$0xff]
        %v171 = vld [vmem:[%s0 + $0x48] sm:$0xff]
        %v172 = vld [vmem:[%s0 + $0x50] sm:$0xff]
        %v173 = vld [vmem:[%s0 + $0x58] sm:$0xff]
        %v174 = vld [vmem:[%s0 + $0x60] sm:$0xff]
        %v175 = vld [vmem:[%s0 + $0x68] sm:$0xff]
        %v176 = vmax.bf16 %v162, 0
        %v177 = vmax.bf16 %v163, 0
        %v178 = vmax.bf16 %v164, 0
        %v179 = vmax.bf16 %v165, 0
        %v180 = vmax.bf16 %v166, 0
        %v181 = vmax.bf16 %v167, 0
        %v182 = vmax.bf16 %v168, 0
        %v183 = vmax.bf16 %v169, 0
        %v184 = vmax.bf16 %v170, 0
        %v185 = vmax.bf16 %v171, 0
        %v186 = vmax.bf16 %v172, 0
        %v187 = vmax.bf16 %v173, 0
        %v188 = vmax.bf16 %v174, 0
        %v189 = vmax.bf16 %v175, 0
        %v190 = vld [vmem:[%s139] sm:$0xff]
        %v191 = vld [vmem:[%s139 + $0x8] sm:$0xff]
        %v192 = vld [vmem:[%s139 + $0x10] sm:$0xff]
        %v193 = vld [vmem:[%s139 + $0x18] sm:$0xff]
        %v194 = vld [vmem:[%s139 + $0x20] sm:$0xff]
        %v195 = vld [vmem:[%s139 + $0x28] sm:$0xff]
        %v196 = vld [vmem:[%s139 + $0x30] sm:$0xff]
        %v197 = vld [vmem:[%s139 + $0x38] sm:$0xff]
        %v198 = vld [vmem:[%s139 + $0x40] sm:$0xff]
        %v199 = vld [vmem:[%s139 + $0x48] sm:$0xff]
        %v200 = vld [vmem:[%s139 + $0x50] sm:$0xff]
        %v201 = vld [vmem:[%s139 + $0x58] sm:$0xff]
        %v202 = vld [vmem:[%s139 + $0x60] sm:$0xff]
        %v203 = vld [vmem:[%s139 + $0x68] sm:$0xff]
        %v204 = vld [vmem:[%s139 + $0x70] sm:$0xff]
        %v205 = vld [vmem:[%s139 + $0x78] sm:$0xff]
        %v206 = vld [vmem:[%s139 + $0x80] sm:$0xff]
        %v207 = vld [vmem:[%s139 + $0x88] sm:$0xff]
        %v208 = vld [vmem:[%s139 + $0x90] sm:$0xff]
        %v209 = vld [vmem:[%s139 + $0x98] sm:$0xff]
        %v210 = vld [vmem:[%s139 + $0xa0] sm:$0xff]
        %v211 = vld [vmem:[%s139 + $0xa8] sm:$0xff]
        %v212 = vld [vmem:[%s139 + $0xb0] sm:$0xff]
        %v213 = vld [vmem:[%s139 + $0xb8] sm:$0xff]
        %v214 = vld [vmem:[%s139 + $0xc0] sm:$0xff]
        %v215 = vld [vmem:[%s139 + $0xc8] sm:$0xff]
        %v216 = vld [vmem:[%s139 + $0xd0] sm:$0xff]
        %v217 = vld [vmem:[%s139 + $0xd8] sm:$0xff]
        %v218 = vld [vmem:[%s139 + $0xe0] sm:$0xff]
        %v219 = vld [vmem:[%s139 + $0xe8] sm:$0xff]
        %v220 = vld [vmem:[%s139 + $0xf0] sm:$0xff]
        %v221 = vld [vmem:[%s139 + $0xf8] sm:$0xff]
        %v222 = vld [vmem:[%s139 + $0x100] sm:$0xff]
        %v223 = vld [vmem:[%s139 + $0x108] sm:$0xff]
        %v224 = vld [vmem:[%s139 + $0x110] sm:$0xff]
        %v225 = vld [vmem:[%s139 + $0x118] sm:$0xff]
        %v226 = vld [vmem:[%s139 + $0x120] sm:$0xff]
        %v227 = vld [vmem:[%s139 + $0x128] sm:$0xff]
        %v228 = vld [vmem:[%s139 + $0x130] sm:$0xff]
        %v229 = vld [vmem:[%s139 + $0x138] sm:$0xff]
        %v230 = vld [vmem:[%s139 + $0x140] sm:$0xff]
        %v231 = vld [vmem:[%s139 + $0x148] sm:$0xff]
        %v232 = vld [vmem:[%s139 + $0x150] sm:$0xff]
        %v233 = vld [vmem:[%s139 + $0x158] sm:$0xff]
        %v234 = vld [vmem:[%s139 + $0x160] sm:$0xff]
        %v235 = vld [vmem:[%s139 + $0x168] sm:$0xff]
        %v236 = vld [vmem:[%s139 + $0x170] sm:$0xff]
        %v237 = vld [vmem:[%s139 + $0x178] sm:$0xff]
        %v238 = vld [vmem:[%s139 + $0x180] sm:$0xff]
        %v239 = vld [vmem:[%s139 + $0x188] sm:$0xff]
        %v240 = vld [vmem:[%s139 + $0x190] sm:$0xff]
        %v241 = vld [vmem:[%s139 + $0x198] sm:$0xff]
        %v242 = vld [vmem:[%s139 + $0x1a0] sm:$0xff]
        %v243 = vld [vmem:[%s139 + $0x1a8] sm:$0xff]
        %v244 = vld [vmem:[%s139 + $0x1b0] sm:$0xff]
        %v245 = vld [vmem:[%s139 + $0x1b8] sm:$0xff]
        %v246 = vld [vmem:[%s139 + $0x1c0] sm:$0xff]
        %v247 = vld [vmem:[%s139 + $0x1c8] sm:$0xff]
        %v248 = vld [vmem:[%s139 + $0x1d0] sm:$0xff]
        %v249 = vld [vmem:[%s139 + $0x1d8] sm:$0xff]
        %v250 = vld [vmem:[%s139 + $0x1e0] sm:$0xff]
        %v251 = vld [vmem:[%s139 + $0x1e8] sm:$0xff]
        %v252 = vld [vmem:[%s139 + $0x1f0] sm:$0xff]
        %v253 = vld [vmem:[%s139 + $0x1f8] sm:$0xff]
        %v254 = vld [vmem:[%s139 + $0x200] sm:$0xff]
        %v255 = vld [vmem:[%s139 + $0x208] sm:$0xff]
        %v256 = vld [vmem:[%s139 + $0x210] sm:$0xff]
        %v257 = vld [vmem:[%s139 + $0x218] sm:$0xff]
        %v258 = vld [vmem:[%s139 + $0x220] sm:$0xff]
        %v259 = vld [vmem:[%s139 + $0x228] sm:$0xff]
        %v260 = vld [vmem:[%s139 + $0x230] sm:$0xff]
        %v261 = vld [vmem:[%s139 + $0x238] sm:$0xff]
        %v262 = vld [vmem:[%s139 + $0x240] sm:$0xff]
        %v263 = vld [vmem:[%s139 + $0x248] sm:$0xff]
        %v264 = vld [vmem:[%s139 + $0x250] sm:$0xff]
        %v265 = vld [vmem:[%s139 + $0x258] sm:$0xff]
        %v266 = vld [vmem:[%s139 + $0x260] sm:$0xff]
        %v267 = vld [vmem:[%s139 + $0x268] sm:$0xff]
        %v268 = vld [vmem:[%s139 + $0x270] sm:$0xff]
        %v269 = vld [vmem:[%s139 + $0x278] sm:$0xff]
        %v270 = vld [vmem:[%s139 + $0x280] sm:$0xff]
        %v271 = vld [vmem:[%s139 + $0x288] sm:$0xff]
        %v272 = vld [vmem:[%s139 + $0x290] sm:$0xff]
        %v273 = vld [vmem:[%s139 + $0x298] sm:$0xff]
        %v274 = vld [vmem:[%s139 + $0x2a0] sm:$0xff]
        %v275 = vld [vmem:[%s139 + $0x2a8] sm:$0xff]
        %v276 = vld [vmem:[%s139 + $0x2b0] sm:$0xff]
        %v277 = vld [vmem:[%s139 + $0x2b8] sm:$0xff]
        %v278 = vld [vmem:[%s139 + $0x2c0] sm:$0xff]
        %v279 = vld [vmem:[%s139 + $0x2c8] sm:$0xff]
        %v280 = vld [vmem:[%s139 + $0x2d0] sm:$0xff]
        %v281 = vld [vmem:[%s139 + $0x2d8] sm:$0xff]
        %v282 = vld [vmem:[%s139 + $0x2e0] sm:$0xff]
        %v283 = vld [vmem:[%s139 + $0x2e8] sm:$0xff]
        %v284 = vld [vmem:[%s139 + $0x2f0] sm:$0xff]
        %v285 = vld [vmem:[%s139 + $0x2f8] sm:$0xff]
        %v286 = vld [vmem:[%s139 + $0x300] sm:$0xff]
        %v287 = vld [vmem:[%s139 + $0x308] sm:$0xff]
        %v288 = vld [vmem:[%s139 + $0x310] sm:$0xff]
        %v289 = vld [vmem:[%s139 + $0x318] sm:$0xff]
        %v290 = vld [vmem:[%s139 + $0x320] sm:$0xff]
        %v291 = vld [vmem:[%s139 + $0x328] sm:$0xff]
        %v292 = vld [vmem:[%s139 + $0x330] sm:$0xff]
        %v293 = vld [vmem:[%s139 + $0x338] sm:$0xff]
        %v294 = vld [vmem:[%s139 + $0x340] sm:$0xff]
        %v295 = vld [vmem:[%s139 + $0x348] sm:$0xff]
        %v296 = vld [vmem:[%s139 + $0x350] sm:$0xff]
        %v297 = vld [vmem:[%s139 + $0x358] sm:$0xff]
        %v298 = vld [vmem:[%s139 + $0x360] sm:$0xff]
        %v299 = vld [vmem:[%s139 + $0x368] sm:$0xff]
        %v300 = vld [vmem:[%s139 + $0x370] sm:$0xff]
        %v301 = vld [vmem:[%s139 + $0x378] sm:$0xff]
        %v302 = vld [vmem:[%s139 + $0x380] sm:$0xff]
        %v303 = vld [vmem:[%s139 + $0x388] sm:$0xff]
        %v304 = vld [vmem:[%s139 + $0x390] sm:$0xff]
        %v305 = vld [vmem:[%s139 + $0x398] sm:$0xff]
        %v306 = vld [vmem:[%s139 + $0x3a0] sm:$0xff]
        %v307 = vld [vmem:[%s139 + $0x3a8] sm:$0xff]
        %v308 = vld [vmem:[%s139 + $0x3b0] sm:$0xff]
        %v309 = vld [vmem:[%s139 + $0x3b8] sm:$0xff]
        %v310 = vld [vmem:[%s139 + $0x3c0] sm:$0xff]
        %v311 = vld [vmem:[%s139 + $0x3c8] sm:$0xff]
        %v312 = vld [vmem:[%s139 + $0x3d0] sm:$0xff]
        %v313 = vld [vmem:[%s139 + $0x3d8] sm:$0xff]
        %v314 = vld [vmem:[%s139 + $0x3e0] sm:$0xff]
        %v315 = vld [vmem:[%s139 + $0x3e8] sm:$0xff]
        %v316 = vld [vmem:[%s139 + $0x3f0] sm:$0xff]
        %v317 = vld [vmem:[%s139 + $0x3f8] sm:$0xff]
        %v318 = vld [vmem:[%s139 + $0x400] sm:$0xff]
        %v319 = vld [vmem:[%s139 + $0x408] sm:$0xff]
        %v320 = vld [vmem:[%s139 + $0x410] sm:$0xff]
        %v321 = vld [vmem:[%s139 + $0x418] sm:$0xff]
        %v322 = vld [vmem:[%s139 + $0x420] sm:$0xff]
        %v323 = vld [vmem:[%s139 + $0x428] sm:$0xff]
        %v324 = vld [vmem:[%s139 + $0x430] sm:$0xff]
        %v325 = vld [vmem:[%s139 + $0x438] sm:$0xff]
        %v326 = vld [vmem:[%s139 + $0x440] sm:$0xff]
        %v327 = vld [vmem:[%s139 + $0x448] sm:$0xff]
        %v328 = vld [vmem:[%s139 + $0x450] sm:$0xff]
        %v329 = vld [vmem:[%s139 + $0x458] sm:$0xff]
        %v330 = vld [vmem:[%s139 + $0x460] sm:$0xff]
        %v331 = vld [vmem:[%s139 + $0x468] sm:$0xff]
        %v332 = vld [vmem:[%s139 + $0x470] sm:$0xff]
        %v333 = vld [vmem:[%s139 + $0x478] sm:$0xff]
        %v334 = vld [vmem:[%s139 + $0x480] sm:$0xff]
        %v335 = vld [vmem:[%s139 + $0x488] sm:$0xff]
        %v336 = vld [vmem:[%s139 + $0x490] sm:$0xff]
        %v337 = vld [vmem:[%s139 + $0x498] sm:$0xff]
        %v338 = vld [vmem:[%s139 + $0x4a0] sm:$0xff]
        %v339 = vld [vmem:[%s139 + $0x4a8] sm:$0xff]
        %v340 = vld [vmem:[%s139 + $0x4b0] sm:$0xff]
        %v341 = vld [vmem:[%s139 + $0x4b8] sm:$0xff]
        %v342 = vld [vmem:[%s139 + $0x4c0] sm:$0xff]
        %v343 = vld [vmem:[%s139 + $0x4c8] sm:$0xff]
        %v344 = vld [vmem:[%s139 + $0x4d0] sm:$0xff]
        %v345 = vld [vmem:[%s139 + $0x4d8] sm:$0xff]
        %v346 = vld [vmem:[%s139 + $0x4e0] sm:$0xff]
        %v347 = vld [vmem:[%s139 + $0x4e8] sm:$0xff]
        %v348 = vld [vmem:[%s139 + $0x4f0] sm:$0xff]
        %v349 = vld [vmem:[%s139 + $0x4f8] sm:$0xff]
        %v350 = vld [vmem:[%s139 + $0x500] sm:$0xff]
        %v351 = vld [vmem:[%s139 + $0x508] sm:$0xff]
        %v352 = vld [vmem:[%s139 + $0x510] sm:$0xff]
        %v353 = vld [vmem:[%s139 + $0x518] sm:$0xff]
        %v354 = vld [vmem:[%s139 + $0x520] sm:$0xff]
        %v355 = vld [vmem:[%s139 + $0x528] sm:$0xff]
        %v356 = vld [vmem:[%s139 + $0x530] sm:$0xff]
        %v357 = vld [vmem:[%s139 + $0x538] sm:$0xff]
        %v358 = vld [vmem:[%s139 + $0x540] sm:$0xff]
        %v359 = vld [vmem:[%s139 + $0x548] sm:$0xff]
        %v360 = vld [vmem:[%s139 + $0x550] sm:$0xff]
        %v361 = vld [vmem:[%s139 + $0x558] sm:$0xff]
        %v362 = vld [vmem:[%s139 + $0x560] sm:$0xff]
        %v363 = vld [vmem:[%s139 + $0x568] sm:$0xff]
        %v364 = vld [vmem:[%s139 + $0x570] sm:$0xff]
        %v365 = vld [vmem:[%s139 + $0x578] sm:$0xff]
        %v366 = vld [vmem:[%s139 + $0x580] sm:$0xff]
        %v367 = vld [vmem:[%s139 + $0x588] sm:$0xff]
        %v368 = vld [vmem:[%s139 + $0x590] sm:$0xff]
        %v369 = vld [vmem:[%s139 + $0x598] sm:$0xff]
        %v370 = vld [vmem:[%s139 + $0x5a0] sm:$0xff]
        %v371 = vld [vmem:[%s139 + $0x5a8] sm:$0xff]
        %v372 = vld [vmem:[%s139 + $0x5b0] sm:$0xff]
        %v373 = vld [vmem:[%s139 + $0x5b8] sm:$0xff]
        %v374 = vld [vmem:[%s139 + $0x5c0] sm:$0xff]
        %v375 = vld [vmem:[%s139 + $0x5c8] sm:$0xff]
        %v376 = vld [vmem:[%s139 + $0x5d0] sm:$0xff]
        %v377 = vld [vmem:[%s139 + $0x5d8] sm:$0xff]
        %v378 = vld [vmem:[%s139 + $0x5e0] sm:$0xff]
        %v379 = vld [vmem:[%s139 + $0x5e8] sm:$0xff]
        %v380 = vld [vmem:[%s139 + $0x5f0] sm:$0xff]
        %v381 = vld [vmem:[%s139 + $0x5f8] sm:$0xff]
        %v382 = vld [vmem:[%s139 + $0x600] sm:$0xff]
        %v383 = vld [vmem:[%s139 + $0x608] sm:$0xff]
        %v384 = vld [vmem:[%s139 + $0x610] sm:$0xff]
        %v385 = vld [vmem:[%s139 + $0x618] sm:$0xff]
        %v386 = vld [vmem:[%s139 + $0x620] sm:$0xff]
        %v387 = vld [vmem:[%s139 + $0x628] sm:$0xff]
        %v388 = vld [vmem:[%s139 + $0x630] sm:$0xff]
        %v389 = vld [vmem:[%s139 + $0x638] sm:$0xff]
        %v390 = vld [vmem:[%s139 + $0x640] sm:$0xff]
        %v391 = vld [vmem:[%s139 + $0x648] sm:$0xff]
        %v392 = vld [vmem:[%s139 + $0x650] sm:$0xff]
        %v393 = vld [vmem:[%s139 + $0x658] sm:$0xff]
        %v394 = vld [vmem:[%s139 + $0x660] sm:$0xff]
        %v395 = vld [vmem:[%s139 + $0x668] sm:$0xff]
        %v396 = vld [vmem:[%s139 + $0x670] sm:$0xff]
        %v397 = vld [vmem:[%s139 + $0x678] sm:$0xff]
        %v398 = vld [vmem:[%s139 + $0x680] sm:$0xff]
        %v399 = vld [vmem:[%s139 + $0x688] sm:$0xff]
        %v400 = vld [vmem:[%s139 + $0x690] sm:$0xff]
        %v401 = vld [vmem:[%s139 + $0x698] sm:$0xff]
        %v402 = vld [vmem:[%s139 + $0x6a0] sm:$0xff]
        %v403 = vld [vmem:[%s139 + $0x6a8] sm:$0xff]
        %v404 = vld [vmem:[%s139 + $0x6b0] sm:$0xff]
        %v405 = vld [vmem:[%s139 + $0x6b8] sm:$0xff]
        %v406 = vld [vmem:[%s139 + $0x6c0] sm:$0xff]
        %v407 = vld [vmem:[%s139 + $0x6c8] sm:$0xff]
        %v408 = vld [vmem:[%s139 + $0x6d0] sm:$0xff]
        %v409 = vld [vmem:[%s139 + $0x6d8] sm:$0xff]
        %v410 = vld [vmem:[%s139 + $0x6e0] sm:$0xff]
        %v411 = vld [vmem:[%s139 + $0x6e8] sm:$0xff]
        %v412 = vld [vmem:[%s139 + $0x6f0] sm:$0xff]
        %v413 = vld [vmem:[%s139 + $0x6f8] sm:$0xff]
        %v414 = vld [vmem:[%s139 + $0x700] sm:$0xff]
        %v415 = vld [vmem:[%s139 + $0x708] sm:$0xff]
        %v416 = vld [vmem:[%s139 + $0x710] sm:$0xff]
        %v417 = vld [vmem:[%s139 + $0x718] sm:$0xff]
        %v418 = vld [vmem:[%s139 + $0x720] sm:$0xff]
        %v419 = vld [vmem:[%s139 + $0x728] sm:$0xff]
        %v420 = vld [vmem:[%s139 + $0x730] sm:$0xff]
        %v421 = vld [vmem:[%s139 + $0x738] sm:$0xff]
        %v422 = vld [vmem:[%s139 + $0x740] sm:$0xff]
        %v423 = vld [vmem:[%s139 + $0x748] sm:$0xff]
        %v424 = vld [vmem:[%s139 + $0x750] sm:$0xff]
        %v425 = vld [vmem:[%s139 + $0x758] sm:$0xff]
        %v426 = vld [vmem:[%s139 + $0x760] sm:$0xff]
        %v427 = vld [vmem:[%s139 + $0x768] sm:$0xff]
        %v428 = vld [vmem:[%s139 + $0x770] sm:$0xff]
        %v429 = vld [vmem:[%s139 + $0x778] sm:$0xff]
        %v430 = vld [vmem:[%s139 + $0x780] sm:$0xff]
        %v431 = vld [vmem:[%s139 + $0x788] sm:$0xff]
        %v432 = vld [vmem:[%s139 + $0x790] sm:$0xff]
        %v433 = vld [vmem:[%s139 + $0x798] sm:$0xff]
        %v434 = vld [vmem:[%s139 + $0x7a0] sm:$0xff]
        %v435 = vld [vmem:[%s139 + $0x7a8] sm:$0xff]
        %v436 = vld [vmem:[%s139 + $0x7b0] sm:$0xff]
        %v437 = vld [vmem:[%s139 + $0x7b8] sm:$0xff]
        %v438 = vld [vmem:[%s139 + $0x7c0] sm:$0xff]
        %v439 = vld [vmem:[%s139 + $0x7c8] sm:$0xff]
        %v440 = vld [vmem:[%s139 + $0x7d0] sm:$0xff]
        %v441 = vld [vmem:[%s139 + $0x7d8] sm:$0xff]
        %v442 = vld [vmem:[%s139 + $0x7e0] sm:$0xff]
        %v443 = vld [vmem:[%s139 + $0x7e8] sm:$0xff]
        %v444 = vld [vmem:[%s139 + $0x7f0] sm:$0xff]
        %v445 = vld [vmem:[%s139 + $0x7f8] sm:$0xff]
        %v460 = vunpack.c.l.b16 %v176
        %v461 = vunpack.c.h.b16 %v176
        %v462 = vunpack.c.l.b16 %v177
        %v463 = vunpack.c.h.b16 %v177
        %v464 = vunpack.c.l.b16 %v178
        %v465 = vunpack.c.h.b16 %v178
        %v466 = vunpack.c.l.b16 %v179
        %v467 = vunpack.c.h.b16 %v179
        %v468 = vunpack.c.l.b16 %v180
        %v469 = vunpack.c.h.b16 %v180
        %v470 = vunpack.c.l.b16 %v181
        %v471 = vunpack.c.h.b16 %v181
        %v472 = vunpack.c.l.b16 %v182
        %v473 = vunpack.c.h.b16 %v182
        %v474 = vunpack.c.l.b16 %v183
        %v475 = vunpack.c.h.b16 %v183
        %v476 = vunpack.c.l.b16 %v184
        %v477 = vunpack.c.h.b16 %v184
        %v478 = vunpack.c.l.b16 %v185
        %v479 = vunpack.c.h.b16 %v185
        %v480 = vunpack.c.l.b16 %v186
        %v481 = vunpack.c.h.b16 %v186
        %v482 = vunpack.c.l.b16 %v187
        %v483 = vunpack.c.h.b16 %v187
        %v484 = vunpack.c.l.b16 %v188
        %v485 = vunpack.c.h.b16 %v188
        %v486 = vunpack.c.l.b16 %v189
        %v487 = vunpack.c.h.b16 %v189
        %v488 = vpack.c.b16 %v464, %v460
        %v489 = vpack.c.b16 %v465, %v461
        %v490 = vpack.c.b16 %v466, %v462
        %v491 = vpack.c.b16 %v467, %v463
        %v492 = vpack.c.b16 %v472, %v468
        %v493 = vpack.c.b16 %v473, %v469
        %v494 = vpack.c.b16 %v474, %v470
        %v495 = vpack.c.b16 %v475, %v471
        %v496 = vpack.c.b16 %v480, %v476
        %v497 = vpack.c.b16 %v481, %v477
        %v498 = vpack.c.b16 %v482, %v478
        %v499 = vpack.c.b16 %v483, %v479
        %v500 = vpack.c.b16 %v484, %v484
        %v501 = vpack.c.b16 %v485, %v485
        %v502 = vpack.c.b16 %v486, %v486
        %v503 = vpack.c.b16 %v487, %v487
        %v776 = vunpack.c.l.b16 %v190
        %v777 = vunpack.c.h.b16 %v190
        %v778 = vunpack.c.l.b16 %v191
        %v779 = vunpack.c.h.b16 %v191
        %v780 = vunpack.c.l.b16 %v192
        %v781 = vunpack.c.h.b16 %v192
        %v782 = vunpack.c.l.b16 %v193
        %v783 = vunpack.c.h.b16 %v193
        %v784 = vunpack.c.l.b16 %v194
        %v785 = vunpack.c.h.b16 %v194
        %v786 = vunpack.c.l.b16 %v195
        %v787 = vunpack.c.h.b16 %v195
        %v788 = vunpack.c.l.b16 %v196
        %v789 = vunpack.c.h.b16 %v196
        %v790 = vunpack.c.l.b16 %v197
        %v791 = vunpack.c.h.b16 %v197
        %v792 = vunpack.c.l.b16 %v198
        %v793 = vunpack.c.h.b16 %v198
        %v794 = vunpack.c.l.b16 %v199
        %v795 = vunpack.c.h.b16 %v199
        %v796 = vunpack.c.l.b16 %v200
        %v797 = vunpack.c.h.b16 %v200
        %v798 = vunpack.c.l.b16 %v201
        %v799 = vunpack.c.h.b16 %v201
        %v800 = vunpack.c.l.b16 %v202
        %v801 = vunpack.c.h.b16 %v202
        %v802 = vunpack.c.l.b16 %v203
        %v803 = vunpack.c.h.b16 %v203
        %v804 = vunpack.c.l.b16 %v204
        %v805 = vunpack.c.h.b16 %v204
        %v806 = vunpack.c.l.b16 %v205
        %v807 = vunpack.c.h.b16 %v205
        %v808 = vunpack.c.l.b16 %v206
        %v809 = vunpack.c.h.b16 %v206
        %v810 = vunpack.c.l.b16 %v207
        %v811 = vunpack.c.h.b16 %v207
        %v812 = vunpack.c.l.b16 %v208
        %v813 = vunpack.c.h.b16 %v208
        %v814 = vunpack.c.l.b16 %v209
        %v815 = vunpack.c.h.b16 %v209
        %v816 = vunpack.c.l.b16 %v210
        %v817 = vunpack.c.h.b16 %v210
        %v818 = vunpack.c.l.b16 %v211
        %v819 = vunpack.c.h.b16 %v211
        %v820 = vunpack.c.l.b16 %v212
        %v821 = vunpack.c.h.b16 %v212
        %v822 = vunpack.c.l.b16 %v213
        %v823 = vunpack.c.h.b16 %v213
        %v824 = vunpack.c.l.b16 %v214
        %v825 = vunpack.c.h.b16 %v214
        %v826 = vunpack.c.l.b16 %v215
        %v827 = vunpack.c.h.b16 %v215
        %v828 = vunpack.c.l.b16 %v216
        %v829 = vunpack.c.h.b16 %v216
        %v830 = vunpack.c.l.b16 %v217
        %v831 = vunpack.c.h.b16 %v217
        %v832 = vunpack.c.l.b16 %v218
        %v833 = vunpack.c.h.b16 %v218
        %v834 = vunpack.c.l.b16 %v219
        %v835 = vunpack.c.h.b16 %v219
        %v836 = vunpack.c.l.b16 %v220
        %v837 = vunpack.c.h.b16 %v220
        %v838 = vunpack.c.l.b16 %v221
        %v839 = vunpack.c.h.b16 %v221
        %v840 = vunpack.c.l.b16 %v222
        %v841 = vunpack.c.h.b16 %v222
        %v842 = vunpack.c.l.b16 %v223
        %v843 = vunpack.c.h.b16 %v223
        %v844 = vunpack.c.l.b16 %v224
        %v845 = vunpack.c.h.b16 %v224
        %v846 = vunpack.c.l.b16 %v225
        %v847 = vunpack.c.h.b16 %v225
        %v848 = vunpack.c.l.b16 %v226
        %v849 = vunpack.c.h.b16 %v226
        %v850 = vunpack.c.l.b16 %v227
        %v851 = vunpack.c.h.b16 %v227
        %v852 = vunpack.c.l.b16 %v228
        %v853 = vunpack.c.h.b16 %v228
        %v854 = vunpack.c.l.b16 %v229
        %v855 = vunpack.c.h.b16 %v229
        %v856 = vunpack.c.l.b16 %v230
        %v857 = vunpack.c.h.b16 %v230
        %v858 = vunpack.c.l.b16 %v231
        %v859 = vunpack.c.h.b16 %v231
        %v860 = vunpack.c.l.b16 %v232
        %v861 = vunpack.c.h.b16 %v232
        %v862 = vunpack.c.l.b16 %v233
        %v863 = vunpack.c.h.b16 %v233
        %v864 = vunpack.c.l.b16 %v234
        %v865 = vunpack.c.h.b16 %v234
        %v866 = vunpack.c.l.b16 %v235
        %v867 = vunpack.c.h.b16 %v235
        %v868 = vunpack.c.l.b16 %v236
        %v869 = vunpack.c.h.b16 %v236
        %v870 = vunpack.c.l.b16 %v237
        %v871 = vunpack.c.h.b16 %v237
        %v872 = vunpack.c.l.b16 %v238
        %v873 = vunpack.c.h.b16 %v238
        %v874 = vunpack.c.l.b16 %v239
        %v875 = vunpack.c.h.b16 %v239
        %v876 = vunpack.c.l.b16 %v240
        %v877 = vunpack.c.h.b16 %v240
        %v878 = vunpack.c.l.b16 %v241
        %v879 = vunpack.c.h.b16 %v241
        %v880 = vunpack.c.l.b16 %v242
        %v881 = vunpack.c.h.b16 %v242
        %v882 = vunpack.c.l.b16 %v243
        %v883 = vunpack.c.h.b16 %v243
        %v884 = vunpack.c.l.b16 %v244
        %v885 = vunpack.c.h.b16 %v244
        %v886 = vunpack.c.l.b16 %v245
        %v887 = vunpack.c.h.b16 %v245
        %v888 = vunpack.c.l.b16 %v246
        %v889 = vunpack.c.h.b16 %v246
        %v890 = vunpack.c.l.b16 %v247
        %v891 = vunpack.c.h.b16 %v247
        %v892 = vunpack.c.l.b16 %v248
        %v893 = vunpack.c.h.b16 %v248
        %v894 = vunpack.c.l.b16 %v249
        %v895 = vunpack.c.h.b16 %v249
        %v896 = vunpack.c.l.b16 %v250
        %v897 = vunpack.c.h.b16 %v250
        %v898 = vunpack.c.l.b16 %v251
        %v899 = vunpack.c.h.b16 %v251
        %v900 = vunpack.c.l.b16 %v252
        %v901 = vunpack.c.h.b16 %v252
        %v902 = vunpack.c.l.b16 %v253
        %v903 = vunpack.c.h.b16 %v253
        %v904 = vunpack.c.l.b16 %v254
        %v905 = vunpack.c.h.b16 %v254
        %v906 = vunpack.c.l.b16 %v255
        %v907 = vunpack.c.h.b16 %v255
        %v908 = vunpack.c.l.b16 %v256
        %v909 = vunpack.c.h.b16 %v256
        %v910 = vunpack.c.l.b16 %v257
        %v911 = vunpack.c.h.b16 %v257
        %v912 = vunpack.c.l.b16 %v258
        %v913 = vunpack.c.h.b16 %v258
        %v914 = vunpack.c.l.b16 %v259
        %v915 = vunpack.c.h.b16 %v259
        %v916 = vunpack.c.l.b16 %v260
        %v917 = vunpack.c.h.b16 %v260
        %v918 = vunpack.c.l.b16 %v261
        %v919 = vunpack.c.h.b16 %v261
        %v920 = vunpack.c.l.b16 %v262
        %v921 = vunpack.c.h.b16 %v262
        %v922 = vunpack.c.l.b16 %v263
        %v923 = vunpack.c.h.b16 %v263
        %v924 = vunpack.c.l.b16 %v264
        %v925 = vunpack.c.h.b16 %v264
        %v926 = vunpack.c.l.b16 %v265
        %v927 = vunpack.c.h.b16 %v265
        %v928 = vunpack.c.l.b16 %v266
        %v929 = vunpack.c.h.b16 %v266
        %v930 = vunpack.c.l.b16 %v267
        %v931 = vunpack.c.h.b16 %v267
        %v932 = vunpack.c.l.b16 %v268
        %v933 = vunpack.c.h.b16 %v268
        %v934 = vunpack.c.l.b16 %v269
        %v935 = vunpack.c.h.b16 %v269
        %v936 = vunpack.c.l.b16 %v270
        %v937 = vunpack.c.h.b16 %v270
        %v938 = vunpack.c.l.b16 %v271
        %v939 = vunpack.c.h.b16 %v271
        %v940 = vunpack.c.l.b16 %v272
        %v941 = vunpack.c.h.b16 %v272
        %v942 = vunpack.c.l.b16 %v273
        %v943 = vunpack.c.h.b16 %v273
        %v944 = vunpack.c.l.b16 %v274
        %v945 = vunpack.c.h.b16 %v274
        %v946 = vunpack.c.l.b16 %v275
        %v947 = vunpack.c.h.b16 %v275
        %v948 = vunpack.c.l.b16 %v276
        %v949 = vunpack.c.h.b16 %v276
        %v950 = vunpack.c.l.b16 %v277
        %v951 = vunpack.c.h.b16 %v277
        %v952 = vunpack.c.l.b16 %v278
        %v953 = vunpack.c.h.b16 %v278
        %v954 = vunpack.c.l.b16 %v279
        %v955 = vunpack.c.h.b16 %v279
        %v956 = vunpack.c.l.b16 %v280
        %v957 = vunpack.c.h.b16 %v280
        %v958 = vunpack.c.l.b16 %v281
        %v959 = vunpack.c.h.b16 %v281
        %v960 = vunpack.c.l.b16 %v282
        %v961 = vunpack.c.h.b16 %v282
        %v962 = vunpack.c.l.b16 %v283
        %v963 = vunpack.c.h.b16 %v283
        %v964 = vunpack.c.l.b16 %v284
        %v965 = vunpack.c.h.b16 %v284
        %v966 = vunpack.c.l.b16 %v285
        %v967 = vunpack.c.h.b16 %v285
        %v968 = vunpack.c.l.b16 %v286
        %v969 = vunpack.c.h.b16 %v286
        %v970 = vunpack.c.l.b16 %v287
        %v971 = vunpack.c.h.b16 %v287
        %v972 = vunpack.c.l.b16 %v288
        %v973 = vunpack.c.h.b16 %v288
        %v974 = vunpack.c.l.b16 %v289
        %v975 = vunpack.c.h.b16 %v289
        %v976 = vunpack.c.l.b16 %v290
        %v977 = vunpack.c.h.b16 %v290
        %v978 = vunpack.c.l.b16 %v291
        %v979 = vunpack.c.h.b16 %v291
        %v980 = vunpack.c.l.b16 %v292
        %v981 = vunpack.c.h.b16 %v292
        %v982 = vunpack.c.l.b16 %v293
        %v983 = vunpack.c.h.b16 %v293
        %v984 = vunpack.c.l.b16 %v294
        %v985 = vunpack.c.h.b16 %v294
        %v986 = vunpack.c.l.b16 %v295
        %v987 = vunpack.c.h.b16 %v295
        %v988 = vunpack.c.l.b16 %v296
        %v989 = vunpack.c.h.b16 %v296
        %v990 = vunpack.c.l.b16 %v297
        %v991 = vunpack.c.h.b16 %v297
        %v992 = vunpack.c.l.b16 %v298
        %v993 = vunpack.c.h.b16 %v298
        %v994 = vunpack.c.l.b16 %v299
        %v995 = vunpack.c.h.b16 %v299
        %v996 = vunpack.c.l.b16 %v300
        %v997 = vunpack.c.h.b16 %v300
        %v998 = vunpack.c.l.b16 %v301
        %v999 = vunpack.c.h.b16 %v301
        %v1000 = vunpack.c.l.b16 %v302
        %v1001 = vunpack.c.h.b16 %v302
        %v1002 = vunpack.c.l.b16 %v303
        %v1003 = vunpack.c.h.b16 %v303
        %v1004 = vunpack.c.l.b16 %v304
        %v1005 = vunpack.c.h.b16 %v304
        %v1006 = vunpack.c.l.b16 %v305
        %v1007 = vunpack.c.h.b16 %v305
        %v1008 = vunpack.c.l.b16 %v306
        %v1009 = vunpack.c.h.b16 %v306
        %v1010 = vunpack.c.l.b16 %v307
        %v1011 = vunpack.c.h.b16 %v307
        %v1012 = vunpack.c.l.b16 %v308
        %v1013 = vunpack.c.h.b16 %v308
        %v1014 = vunpack.c.l.b16 %v309
        %v1015 = vunpack.c.h.b16 %v309
        %v1016 = vunpack.c.l.b16 %v310
        %v1017 = vunpack.c.h.b16 %v310
        %v1018 = vunpack.c.l.b16 %v311
        %v1019 = vunpack.c.h.b16 %v311
        %v1020 = vunpack.c.l.b16 %v312
        %v1021 = vunpack.c.h.b16 %v312
        %v1022 = vunpack.c.l.b16 %v313
        %v1023 = vunpack.c.h.b16 %v313
        %v1024 = vunpack.c.l.b16 %v314
        %v1025 = vunpack.c.h.b16 %v314
        %v1026 = vunpack.c.l.b16 %v315
        %v1027 = vunpack.c.h.b16 %v315
        %v1028 = vunpack.c.l.b16 %v316
        %v1029 = vunpack.c.h.b16 %v316
        %v1030 = vunpack.c.l.b16 %v317
        %v1031 = vunpack.c.h.b16 %v317
        %v1032 = vunpack.c.l.b16 %v318
        %v1033 = vunpack.c.h.b16 %v318
        %v1034 = vunpack.c.l.b16 %v319
        %v1035 = vunpack.c.h.b16 %v319
        %v1036 = vunpack.c.l.b16 %v320
        %v1037 = vunpack.c.h.b16 %v320
        %v1038 = vunpack.c.l.b16 %v321
        %v1039 = vunpack.c.h.b16 %v321
        %v1040 = vunpack.c.l.b16 %v322
        %v1041 = vunpack.c.h.b16 %v322
        %v1042 = vunpack.c.l.b16 %v323
        %v1043 = vunpack.c.h.b16 %v323
        %v1044 = vunpack.c.l.b16 %v324
        %v1045 = vunpack.c.h.b16 %v324
        %v1046 = vunpack.c.l.b16 %v325
        %v1047 = vunpack.c.h.b16 %v325
        %v1048 = vunpack.c.l.b16 %v326
        %v1049 = vunpack.c.h.b16 %v326
        %v1050 = vunpack.c.l.b16 %v327
        %v1051 = vunpack.c.h.b16 %v327
        %v1052 = vunpack.c.l.b16 %v328
        %v1053 = vunpack.c.h.b16 %v328
        %v1054 = vunpack.c.l.b16 %v329
        %v1055 = vunpack.c.h.b16 %v329
        %v1056 = vunpack.c.l.b16 %v330
        %v1057 = vunpack.c.h.b16 %v330
        %v1058 = vunpack.c.l.b16 %v331
        %v1059 = vunpack.c.h.b16 %v331
        %v1060 = vunpack.c.l.b16 %v332
        %v1061 = vunpack.c.h.b16 %v332
        %v1062 = vunpack.c.l.b16 %v333
        %v1063 = vunpack.c.h.b16 %v333
        %v1064 = vunpack.c.l.b16 %v334
        %v1065 = vunpack.c.h.b16 %v334
        %v1066 = vunpack.c.l.b16 %v335
        %v1067 = vunpack.c.h.b16 %v335
        %v1068 = vunpack.c.l.b16 %v336
        %v1069 = vunpack.c.h.b16 %v336
        %v1070 = vunpack.c.l.b16 %v337
        %v1071 = vunpack.c.h.b16 %v337
        %v1072 = vunpack.c.l.b16 %v338
        %v1073 = vunpack.c.h.b16 %v338
        %v1074 = vunpack.c.l.b16 %v339
        %v1075 = vunpack.c.h.b16 %v339
        %v1076 = vunpack.c.l.b16 %v340
        %v1077 = vunpack.c.h.b16 %v340
        %v1078 = vunpack.c.l.b16 %v341
        %v1079 = vunpack.c.h.b16 %v341
        %v1080 = vunpack.c.l.b16 %v342
        %v1081 = vunpack.c.h.b16 %v342
        %v1082 = vunpack.c.l.b16 %v343
        %v1083 = vunpack.c.h.b16 %v343
        %v1084 = vunpack.c.l.b16 %v344
        %v1085 = vunpack.c.h.b16 %v344
        %v1086 = vunpack.c.l.b16 %v345
        %v1087 = vunpack.c.h.b16 %v345
        %v1088 = vunpack.c.l.b16 %v346
        %v1089 = vunpack.c.h.b16 %v346
        %v1090 = vunpack.c.l.b16 %v347
        %v1091 = vunpack.c.h.b16 %v347
        %v1092 = vunpack.c.l.b16 %v348
        %v1093 = vunpack.c.h.b16 %v348
        %v1094 = vunpack.c.l.b16 %v349
        %v1095 = vunpack.c.h.b16 %v349
        %v1096 = vunpack.c.l.b16 %v350
        %v1097 = vunpack.c.h.b16 %v350
        %v1098 = vunpack.c.l.b16 %v351
        %v1099 = vunpack.c.h.b16 %v351
        %v1100 = vunpack.c.l.b16 %v352
        %v1101 = vunpack.c.h.b16 %v352
        %v1102 = vunpack.c.l.b16 %v353
        %v1103 = vunpack.c.h.b16 %v353
        %v1104 = vunpack.c.l.b16 %v354
        %v1105 = vunpack.c.h.b16 %v354
        %v1106 = vunpack.c.l.b16 %v355
        %v1107 = vunpack.c.h.b16 %v355
        %v1108 = vunpack.c.l.b16 %v356
        %v1109 = vunpack.c.h.b16 %v356
        %v1110 = vunpack.c.l.b16 %v357
        %v1111 = vunpack.c.h.b16 %v357
        %v1112 = vunpack.c.l.b16 %v358
        %v1113 = vunpack.c.h.b16 %v358
        %v1114 = vunpack.c.l.b16 %v359
        %v1115 = vunpack.c.h.b16 %v359
        %v1116 = vunpack.c.l.b16 %v360
        %v1117 = vunpack.c.h.b16 %v360
        %v1118 = vunpack.c.l.b16 %v361
        %v1119 = vunpack.c.h.b16 %v361
        %v1120 = vunpack.c.l.b16 %v362
        %v1121 = vunpack.c.h.b16 %v362
        %v1122 = vunpack.c.l.b16 %v363
        %v1123 = vunpack.c.h.b16 %v363
        %v1124 = vunpack.c.l.b16 %v364
        %v1125 = vunpack.c.h.b16 %v364
        %v1126 = vunpack.c.l.b16 %v365
        %v1127 = vunpack.c.h.b16 %v365
        %v1128 = vunpack.c.l.b16 %v366
        %v1129 = vunpack.c.h.b16 %v366
        %v1130 = vunpack.c.l.b16 %v367
        %v1131 = vunpack.c.h.b16 %v367
        %v1132 = vunpack.c.l.b16 %v368
        %v1133 = vunpack.c.h.b16 %v368
        %v1134 = vunpack.c.l.b16 %v369
        %v1135 = vunpack.c.h.b16 %v369
        %v1136 = vunpack.c.l.b16 %v370
        %v1137 = vunpack.c.h.b16 %v370
        %v1138 = vunpack.c.l.b16 %v371
        %v1139 = vunpack.c.h.b16 %v371
        %v1140 = vunpack.c.l.b16 %v372
        %v1141 = vunpack.c.h.b16 %v372
        %v1142 = vunpack.c.l.b16 %v373
        %v1143 = vunpack.c.h.b16 %v373
        %v1144 = vunpack.c.l.b16 %v374
        %v1145 = vunpack.c.h.b16 %v374
        %v1146 = vunpack.c.l.b16 %v375
        %v1147 = vunpack.c.h.b16 %v375
        %v1148 = vunpack.c.l.b16 %v376
        %v1149 = vunpack.c.h.b16 %v376
        %v1150 = vunpack.c.l.b16 %v377
        %v1151 = vunpack.c.h.b16 %v377
        %v1152 = vunpack.c.l.b16 %v378
        %v1153 = vunpack.c.h.b16 %v378
        %v1154 = vunpack.c.l.b16 %v379
        %v1155 = vunpack.c.h.b16 %v379
        %v1156 = vunpack.c.l.b16 %v380
        %v1157 = vunpack.c.h.b16 %v380
        %v1158 = vunpack.c.l.b16 %v381
        %v1159 = vunpack.c.h.b16 %v381
        %v1160 = vunpack.c.l.b16 %v382
        %v1161 = vunpack.c.h.b16 %v382
        %v1162 = vunpack.c.l.b16 %v383
        %v1163 = vunpack.c.h.b16 %v383
        %v1164 = vunpack.c.l.b16 %v384
        %v1165 = vunpack.c.h.b16 %v384
        %v1166 = vunpack.c.l.b16 %v385
        %v1167 = vunpack.c.h.b16 %v385
        %v1168 = vunpack.c.l.b16 %v386
        %v1169 = vunpack.c.h.b16 %v386
        %v1170 = vunpack.c.l.b16 %v387
        %v1171 = vunpack.c.h.b16 %v387
        %v1172 = vunpack.c.l.b16 %v388
        %v1173 = vunpack.c.h.b16 %v388
        %v1174 = vunpack.c.l.b16 %v389
        %v1175 = vunpack.c.h.b16 %v389
        %v1176 = vunpack.c.l.b16 %v390
        %v1177 = vunpack.c.h.b16 %v390
        %v1178 = vunpack.c.l.b16 %v391
        %v1179 = vunpack.c.h.b16 %v391
        %v1180 = vunpack.c.l.b16 %v392
        %v1181 = vunpack.c.h.b16 %v392
        %v1182 = vunpack.c.l.b16 %v393
        %v1183 = vunpack.c.h.b16 %v393
        %v1184 = vunpack.c.l.b16 %v394
        %v1185 = vunpack.c.h.b16 %v394
        %v1186 = vunpack.c.l.b16 %v395
        %v1187 = vunpack.c.h.b16 %v395
        %v1188 = vunpack.c.l.b16 %v396
        %v1189 = vunpack.c.h.b16 %v396
        %v1190 = vunpack.c.l.b16 %v397
        %v1191 = vunpack.c.h.b16 %v397
        %v1192 = vunpack.c.l.b16 %v398
        %v1193 = vunpack.c.h.b16 %v398
        %v1194 = vunpack.c.l.b16 %v399
        %v1195 = vunpack.c.h.b16 %v399
        %v1196 = vunpack.c.l.b16 %v400
        %v1197 = vunpack.c.h.b16 %v400
        %v1198 = vunpack.c.l.b16 %v401
        %v1199 = vunpack.c.h.b16 %v401
        %v1200 = vunpack.c.l.b16 %v402
        %v1201 = vunpack.c.h.b16 %v402
        %v1202 = vunpack.c.l.b16 %v403
        %v1203 = vunpack.c.h.b16 %v403
        %v1204 = vunpack.c.l.b16 %v404
        %v1205 = vunpack.c.h.b16 %v404
        %v1206 = vunpack.c.l.b16 %v405
        %v1207 = vunpack.c.h.b16 %v405
        %v1208 = vunpack.c.l.b16 %v406
        %v1209 = vunpack.c.h.b16 %v406
        %v1210 = vunpack.c.l.b16 %v407
        %v1211 = vunpack.c.h.b16 %v407
        %v1212 = vunpack.c.l.b16 %v408
        %v1213 = vunpack.c.h.b16 %v408
        %v1214 = vunpack.c.l.b16 %v409
        %v1215 = vunpack.c.h.b16 %v409
        %v1216 = vunpack.c.l.b16 %v410
        %v1217 = vunpack.c.h.b16 %v410
        %v1218 = vunpack.c.l.b16 %v411
        %v1219 = vunpack.c.h.b16 %v411
        %v1220 = vunpack.c.l.b16 %v412
        %v1221 = vunpack.c.h.b16 %v412
        %v1222 = vunpack.c.l.b16 %v413
        %v1223 = vunpack.c.h.b16 %v413
        %v1224 = vunpack.c.l.b16 %v414
        %v1225 = vunpack.c.h.b16 %v414
        %v1226 = vunpack.c.l.b16 %v415
        %v1227 = vunpack.c.h.b16 %v415
        %v1228 = vunpack.c.l.b16 %v416
        %v1229 = vunpack.c.h.b16 %v416
        %v1230 = vunpack.c.l.b16 %v417
        %v1231 = vunpack.c.h.b16 %v417
        %v1232 = vunpack.c.l.b16 %v418
        %v1233 = vunpack.c.h.b16 %v418
        %v1234 = vunpack.c.l.b16 %v419
        %v1235 = vunpack.c.h.b16 %v419
        %v1236 = vunpack.c.l.b16 %v420
        %v1237 = vunpack.c.h.b16 %v420
        %v1238 = vunpack.c.l.b16 %v421
        %v1239 = vunpack.c.h.b16 %v421
        %v1240 = vunpack.c.l.b16 %v422
        %v1241 = vunpack.c.h.b16 %v422
        %v1242 = vunpack.c.l.b16 %v423
        %v1243 = vunpack.c.h.b16 %v423
        %v1244 = vunpack.c.l.b16 %v424
        %v1245 = vunpack.c.h.b16 %v424
        %v1246 = vunpack.c.l.b16 %v425
        %v1247 = vunpack.c.h.b16 %v425
        %v1248 = vunpack.c.l.b16 %v426
        %v1249 = vunpack.c.h.b16 %v426
        %v1250 = vunpack.c.l.b16 %v427
        %v1251 = vunpack.c.h.b16 %v427
        %v1252 = vunpack.c.l.b16 %v428
        %v1253 = vunpack.c.h.b16 %v428
        %v1254 = vunpack.c.l.b16 %v429
        %v1255 = vunpack.c.h.b16 %v429
        %v1256 = vunpack.c.l.b16 %v430
        %v1257 = vunpack.c.h.b16 %v430
        %v1258 = vunpack.c.l.b16 %v431
        %v1259 = vunpack.c.h.b16 %v431
        %v1260 = vunpack.c.l.b16 %v432
        %v1261 = vunpack.c.h.b16 %v432
        %v1262 = vunpack.c.l.b16 %v433
        %v1263 = vunpack.c.h.b16 %v433
        %v1264 = vunpack.c.l.b16 %v434
        %v1265 = vunpack.c.h.b16 %v434
        %v1266 = vunpack.c.l.b16 %v435
        %v1267 = vunpack.c.h.b16 %v435
        %v1268 = vunpack.c.l.b16 %v436
        %v1269 = vunpack.c.h.b16 %v436
        %v1270 = vunpack.c.l.b16 %v437
        %v1271 = vunpack.c.h.b16 %v437
        %v1272 = vunpack.c.l.b16 %v438
        %v1273 = vunpack.c.h.b16 %v438
        %v1274 = vunpack.c.l.b16 %v439
        %v1275 = vunpack.c.h.b16 %v439
        %v1276 = vunpack.c.l.b16 %v440
        %v1277 = vunpack.c.h.b16 %v440
        %v1278 = vunpack.c.l.b16 %v441
        %v1279 = vunpack.c.h.b16 %v441
        %v1280 = vunpack.c.l.b16 %v442
        %v1281 = vunpack.c.h.b16 %v442
        %v1282 = vunpack.c.l.b16 %v443
        %v1283 = vunpack.c.h.b16 %v443
        %v1284 = vunpack.c.l.b16 %v444
        %v1285 = vunpack.c.h.b16 %v444
        %v1286 = vunpack.c.l.b16 %v445
        %v1287 = vunpack.c.h.b16 %v445
        %v1288 = vpack.c.b16 %v780, %v776
        %v1289 = vpack.c.b16 %v781, %v777
        %v1290 = vpack.c.b16 %v782, %v778
        %v1291 = vpack.c.b16 %v783, %v779
        %v1292 = vpack.c.b16 %v788, %v784
        %v1293 = vpack.c.b16 %v789, %v785
        %v1294 = vpack.c.b16 %v790, %v786
        %v1295 = vpack.c.b16 %v791, %v787
        %v1296 = vpack.c.b16 %v796, %v792
        %v1297 = vpack.c.b16 %v797, %v793
        %v1298 = vpack.c.b16 %v798, %v794
        %v1299 = vpack.c.b16 %v799, %v795
        %v1300 = vpack.c.b16 %v804, %v800
        %v1301 = vpack.c.b16 %v805, %v801
        %v1302 = vpack.c.b16 %v806, %v802
        %v1303 = vpack.c.b16 %v807, %v803
        %v1304 = vpack.c.b16 %v812, %v808
        %v1305 = vpack.c.b16 %v813, %v809
        %v1306 = vpack.c.b16 %v814, %v810
        %v1307 = vpack.c.b16 %v815, %v811
        %v1308 = vpack.c.b16 %v820, %v816
        %v1309 = vpack.c.b16 %v821, %v817
        %v1310 = vpack.c.b16 %v822, %v818
        %v1311 = vpack.c.b16 %v823, %v819
        %v1312 = vpack.c.b16 %v828, %v824
        %v1313 = vpack.c.b16 %v829, %v825
        %v1314 = vpack.c.b16 %v830, %v826
        %v1315 = vpack.c.b16 %v831, %v827
        %v1316 = vpack.c.b16 %v836, %v832
        %v1317 = vpack.c.b16 %v837, %v833
        %v1318 = vpack.c.b16 %v838, %v834
        %v1319 = vpack.c.b16 %v839, %v835
        %v1320 = vpack.c.b16 %v844, %v840
        %v1321 = vpack.c.b16 %v845, %v841
        %v1322 = vpack.c.b16 %v846, %v842
        %v1323 = vpack.c.b16 %v847, %v843
        %v1324 = vpack.c.b16 %v852, %v848
        %v1325 = vpack.c.b16 %v853, %v849
        %v1326 = vpack.c.b16 %v854, %v850
        %v1327 = vpack.c.b16 %v855, %v851
        %v1328 = vpack.c.b16 %v860, %v856
        %v1329 = vpack.c.b16 %v861, %v857
        %v1330 = vpack.c.b16 %v862, %v858
        %v1331 = vpack.c.b16 %v863, %v859
        %v1332 = vpack.c.b16 %v868, %v864
        %v1333 = vpack.c.b16 %v869, %v865
        %v1334 = vpack.c.b16 %v870, %v866
        %v1335 = vpack.c.b16 %v871, %v867
        %v1336 = vpack.c.b16 %v876, %v872
        %v1337 = vpack.c.b16 %v877, %v873
        %v1338 = vpack.c.b16 %v878, %v874
        %v1339 = vpack.c.b16 %v879, %v875
        %v1340 = vpack.c.b16 %v884, %v880
        %v1341 = vpack.c.b16 %v885, %v881
        %v1342 = vpack.c.b16 %v886, %v882
        %v1343 = vpack.c.b16 %v887, %v883
        %v1344 = vpack.c.b16 %v892, %v888
        %v1345 = vpack.c.b16 %v893, %v889
        %v1346 = vpack.c.b16 %v894, %v890
        %v1347 = vpack.c.b16 %v895, %v891
        %v1348 = vpack.c.b16 %v900, %v896
        %v1349 = vpack.c.b16 %v901, %v897
        %v1350 = vpack.c.b16 %v902, %v898
        %v1351 = vpack.c.b16 %v903, %v899
        %v1352 = vpack.c.b16 %v908, %v904
        %v1353 = vpack.c.b16 %v909, %v905
        %v1354 = vpack.c.b16 %v910, %v906
        %v1355 = vpack.c.b16 %v911, %v907
        %v1356 = vpack.c.b16 %v916, %v912
        %v1357 = vpack.c.b16 %v917, %v913
        %v1358 = vpack.c.b16 %v918, %v914
        %v1359 = vpack.c.b16 %v919, %v915
        %v1360 = vpack.c.b16 %v924, %v920
        %v1361 = vpack.c.b16 %v925, %v921
        %v1362 = vpack.c.b16 %v926, %v922
        %v1363 = vpack.c.b16 %v927, %v923
        %v1364 = vpack.c.b16 %v932, %v928
        %v1365 = vpack.c.b16 %v933, %v929
        %v1366 = vpack.c.b16 %v934, %v930
        %v1367 = vpack.c.b16 %v935, %v931
        %v1368 = vpack.c.b16 %v940, %v936
        %v1369 = vpack.c.b16 %v941, %v937
        %v1370 = vpack.c.b16 %v942, %v938
        %v1371 = vpack.c.b16 %v943, %v939
        %v1372 = vpack.c.b16 %v948, %v944
        %v1373 = vpack.c.b16 %v949, %v945
        %v1374 = vpack.c.b16 %v950, %v946
        %v1375 = vpack.c.b16 %v951, %v947
        %v1376 = vpack.c.b16 %v956, %v952
        %v1377 = vpack.c.b16 %v957, %v953
        %v1378 = vpack.c.b16 %v958, %v954
        %v1379 = vpack.c.b16 %v959, %v955
        %v1380 = vpack.c.b16 %v964, %v960
        %v1381 = vpack.c.b16 %v965, %v961
        %v1382 = vpack.c.b16 %v966, %v962
        %v1383 = vpack.c.b16 %v967, %v963
        %v1384 = vpack.c.b16 %v972, %v968
        %v1385 = vpack.c.b16 %v973, %v969
        %v1386 = vpack.c.b16 %v974, %v970
        %v1387 = vpack.c.b16 %v975, %v971
        %v1388 = vpack.c.b16 %v980, %v976
        %v1389 = vpack.c.b16 %v981, %v977
        %v1390 = vpack.c.b16 %v982, %v978
        %v1391 = vpack.c.b16 %v983, %v979
        %v1392 = vpack.c.b16 %v988, %v984
        %v1393 = vpack.c.b16 %v989, %v985
        %v1394 = vpack.c.b16 %v990, %v986
        %v1395 = vpack.c.b16 %v991, %v987
        %v1396 = vpack.c.b16 %v996, %v992
        %v1397 = vpack.c.b16 %v997, %v993
        %v1398 = vpack.c.b16 %v998, %v994
        %v1399 = vpack.c.b16 %v999, %v995
        %v1400 = vpack.c.b16 %v1004, %v1000
        %v1401 = vpack.c.b16 %v1005, %v1001
        %v1402 = vpack.c.b16 %v1006, %v1002
        %v1403 = vpack.c.b16 %v1007, %v1003
        %v1404 = vpack.c.b16 %v1012, %v1008
        %v1405 = vpack.c.b16 %v1013, %v1009
        %v1406 = vpack.c.b16 %v1014, %v1010
        %v1407 = vpack.c.b16 %v1015, %v1011
        %v1408 = vpack.c.b16 %v1020, %v1016
        %v1409 = vpack.c.b16 %v1021, %v1017
        %v1410 = vpack.c.b16 %v1022, %v1018
        %v1411 = vpack.c.b16 %v1023, %v1019
        %v1412 = vpack.c.b16 %v1028, %v1024
        %v1413 = vpack.c.b16 %v1029, %v1025
        %v1414 = vpack.c.b16 %v1030, %v1026
        %v1415 = vpack.c.b16 %v1031, %v1027
        %v1416 = vpack.c.b16 %v1036, %v1032
        %v1417 = vpack.c.b16 %v1037, %v1033
        %v1418 = vpack.c.b16 %v1038, %v1034
        %v1419 = vpack.c.b16 %v1039, %v1035
        %v1420 = vpack.c.b16 %v1044, %v1040
        %v1421 = vpack.c.b16 %v1045, %v1041
        %v1422 = vpack.c.b16 %v1046, %v1042
        %v1423 = vpack.c.b16 %v1047, %v1043
        %v1424 = vpack.c.b16 %v1052, %v1048
        %v1425 = vpack.c.b16 %v1053, %v1049
        %v1426 = vpack.c.b16 %v1054, %v1050
        %v1427 = vpack.c.b16 %v1055, %v1051
        %v1428 = vpack.c.b16 %v1060, %v1056
        %v1429 = vpack.c.b16 %v1061, %v1057
        %v1430 = vpack.c.b16 %v1062, %v1058
        %v1431 = vpack.c.b16 %v1063, %v1059
        %v1432 = vpack.c.b16 %v1068, %v1064
        %v1433 = vpack.c.b16 %v1069, %v1065
        %v1434 = vpack.c.b16 %v1070, %v1066
        %v1435 = vpack.c.b16 %v1071, %v1067
        %v1436 = vpack.c.b16 %v1076, %v1072
        %v1437 = vpack.c.b16 %v1077, %v1073
        %v1438 = vpack.c.b16 %v1078, %v1074
        %v1439 = vpack.c.b16 %v1079, %v1075
        %v1440 = vpack.c.b16 %v1084, %v1080
        %v1441 = vpack.c.b16 %v1085, %v1081
        %v1442 = vpack.c.b16 %v1086, %v1082
        %v1443 = vpack.c.b16 %v1087, %v1083
        %v1444 = vpack.c.b16 %v1092, %v1088
        %v1445 = vpack.c.b16 %v1093, %v1089
        %v1446 = vpack.c.b16 %v1094, %v1090
        %v1447 = vpack.c.b16 %v1095, %v1091
        %v1448 = vpack.c.b16 %v1100, %v1096
        %v1449 = vpack.c.b16 %v1101, %v1097
        %v1450 = vpack.c.b16 %v1102, %v1098
        %v1451 = vpack.c.b16 %v1103, %v1099
        %v1452 = vpack.c.b16 %v1108, %v1104
        %v1453 = vpack.c.b16 %v1109, %v1105
        %v1454 = vpack.c.b16 %v1110, %v1106
        %v1455 = vpack.c.b16 %v1111, %v1107
        %v1456 = vpack.c.b16 %v1116, %v1112
        %v1457 = vpack.c.b16 %v1117, %v1113
        %v1458 = vpack.c.b16 %v1118, %v1114
        %v1459 = vpack.c.b16 %v1119, %v1115
        %v1460 = vpack.c.b16 %v1124, %v1120
        %v1461 = vpack.c.b16 %v1125, %v1121
        %v1462 = vpack.c.b16 %v1126, %v1122
        %v1463 = vpack.c.b16 %v1127, %v1123
        %v1464 = vpack.c.b16 %v1132, %v1128
        %v1465 = vpack.c.b16 %v1133, %v1129
        %v1466 = vpack.c.b16 %v1134, %v1130
        %v1467 = vpack.c.b16 %v1135, %v1131
        %v1468 = vpack.c.b16 %v1140, %v1136
        %v1469 = vpack.c.b16 %v1141, %v1137
        %v1470 = vpack.c.b16 %v1142, %v1138
        %v1471 = vpack.c.b16 %v1143, %v1139
        %v1472 = vpack.c.b16 %v1148, %v1144
        %v1473 = vpack.c.b16 %v1149, %v1145
        %v1474 = vpack.c.b16 %v1150, %v1146
        %v1475 = vpack.c.b16 %v1151, %v1147
        %v1476 = vpack.c.b16 %v1156, %v1152
        %v1477 = vpack.c.b16 %v1157, %v1153
        %v1478 = vpack.c.b16 %v1158, %v1154
        %v1479 = vpack.c.b16 %v1159, %v1155
        %v1480 = vpack.c.b16 %v1164, %v1160
        %v1481 = vpack.c.b16 %v1165, %v1161
        %v1482 = vpack.c.b16 %v1166, %v1162
        %v1483 = vpack.c.b16 %v1167, %v1163
        %v1484 = vpack.c.b16 %v1172, %v1168
        %v1485 = vpack.c.b16 %v1173, %v1169
        %v1486 = vpack.c.b16 %v1174, %v1170
        %v1487 = vpack.c.b16 %v1175, %v1171
        %v1488 = vpack.c.b16 %v1180, %v1176
        %v1489 = vpack.c.b16 %v1181, %v1177
        %v1490 = vpack.c.b16 %v1182, %v1178
        %v1491 = vpack.c.b16 %v1183, %v1179
        %v1492 = vpack.c.b16 %v1188, %v1184
        %v1493 = vpack.c.b16 %v1189, %v1185
        %v1494 = vpack.c.b16 %v1190, %v1186
        %v1495 = vpack.c.b16 %v1191, %v1187
        %v1496 = vpack.c.b16 %v1196, %v1192
        %v1497 = vpack.c.b16 %v1197, %v1193
        %v1498 = vpack.c.b16 %v1198, %v1194
        %v1499 = vpack.c.b16 %v1199, %v1195
        %v1500 = vpack.c.b16 %v1204, %v1200
        %v1501 = vpack.c.b16 %v1205, %v1201
        %v1502 = vpack.c.b16 %v1206, %v1202
        %v1503 = vpack.c.b16 %v1207, %v1203
        %v1504 = vpack.c.b16 %v1212, %v1208
        %v1505 = vpack.c.b16 %v1213, %v1209
        %v1506 = vpack.c.b16 %v1214, %v1210
        %v1507 = vpack.c.b16 %v1215, %v1211
        %v1508 = vpack.c.b16 %v1220, %v1216
        %v1509 = vpack.c.b16 %v1221, %v1217
        %v1510 = vpack.c.b16 %v1222, %v1218
        %v1511 = vpack.c.b16 %v1223, %v1219
        %v1512 = vpack.c.b16 %v1228, %v1224
        %v1513 = vpack.c.b16 %v1229, %v1225
        %v1514 = vpack.c.b16 %v1230, %v1226
        %v1515 = vpack.c.b16 %v1231, %v1227
        %v1516 = vpack.c.b16 %v1236, %v1232
        %v1517 = vpack.c.b16 %v1237, %v1233
        %v1518 = vpack.c.b16 %v1238, %v1234
        %v1519 = vpack.c.b16 %v1239, %v1235
        %v1520 = vpack.c.b16 %v1244, %v1240
        %v1521 = vpack.c.b16 %v1245, %v1241
        %v1522 = vpack.c.b16 %v1246, %v1242
        %v1523 = vpack.c.b16 %v1247, %v1243
        %v1524 = vpack.c.b16 %v1252, %v1248
        %v1525 = vpack.c.b16 %v1253, %v1249
        %v1526 = vpack.c.b16 %v1254, %v1250
        %v1527 = vpack.c.b16 %v1255, %v1251
        %v1528 = vpack.c.b16 %v1260, %v1256
        %v1529 = vpack.c.b16 %v1261, %v1257
        %v1530 = vpack.c.b16 %v1262, %v1258
        %v1531 = vpack.c.b16 %v1263, %v1259
        %v1532 = vpack.c.b16 %v1268, %v1264
        %v1533 = vpack.c.b16 %v1269, %v1265
        %v1534 = vpack.c.b16 %v1270, %v1266
        %v1535 = vpack.c.b16 %v1271, %v1267
        %v1536 = vpack.c.b16 %v1276, %v1272
        %v1537 = vpack.c.b16 %v1277, %v1273
        %v1538 = vpack.c.b16 %v1278, %v1274
        %v1539 = vpack.c.b16 %v1279, %v1275
        %v1540 = vpack.c.b16 %v1284, %v1280
        %v1541 = vpack.c.b16 %v1285, %v1281
        %v1542 = vpack.c.b16 %v1286, %v1282
        %v1543 = vpack.c.b16 %v1287, %v1283
        %1800 = vmatprep.subr.bf16.mxu0 %v1289
        %1801 = vmatpush1.bf16.xpose.msra.mxu0 %v1288
        %1802 = vmatprep.subr.bf16.mxu0 %v1293
        %1803 = vmatpush1.bf16.xpose.msra.mxu0 %v1292
        %1804 = vmatprep.subr.bf16.mxu0 %v1297
        %1805 = vmatpush1.bf16.xpose.msra.mxu0 %v1296
        %1806 = vmatprep.subr.bf16.mxu0 %v1301
        %1807 = vmatpush1.bf16.xpose.msra.mxu0 %v1300
        %1808 = vmatprep.subr.bf16.mxu0 %v1305
        %1809 = vmatpush1.bf16.xpose.msra.mxu0 %v1304
        %1810 = vmatprep.subr.bf16.mxu0 %v1309
        %1811 = vmatpush1.bf16.xpose.msra.mxu0 %v1308
        %1812 = vmatprep.subr.bf16.mxu0 %v1313
        %1813 = vmatpush1.bf16.xpose.msra.mxu0 %v1312
        %1814 = vmatprep.subr.bf16.mxu0 %v1317
        %1815 = vmatpush1.bf16.xpose.msra.mxu0 %v1316
        %1816 = vmatprep.subr.bf16.mxu0 %v1321
        %1817 = vmatpush1.bf16.xpose.msra.mxu0 %v1320
        %1818 = vmatprep.subr.bf16.mxu0 %v1325
        %1819 = vmatpush1.bf16.xpose.msra.mxu0 %v1324
        %1820 = vmatprep.subr.bf16.mxu0 %v1329
        %1821 = vmatpush1.bf16.xpose.msra.mxu0 %v1328
        %1822 = vmatprep.subr.bf16.mxu0 %v1333
        %1823 = vmatpush1.bf16.xpose.msra.mxu0 %v1332
        %1824 = vmatprep.subr.bf16.mxu0 %v1337
        %1825 = vmatpush1.bf16.xpose.msra.mxu0 %v1336
        %1826 = vmatprep.subr.bf16.mxu0 %v1341
        %1827 = vmatpush1.bf16.xpose.msra.mxu0 %v1340
        %1828 = vmatprep.subr.bf16.mxu0 %v1345
        %1829 = vmatpush1.bf16.xpose.msra.mxu0 %v1344
        %1830 = vmatprep.subr.bf16.mxu0 %v1349
        %1831 = vmatpush1.bf16.xpose.msra.mxu0 %v1348
        %1832 = vmatprep.mubr.bf16.mxu0 %v489
        %1833 = vmatmul.mubr.bf16.gmra.mrb[0].mxu0 %v488
        %v1834 = vpop.f32.mrb[0].mxu0
        %v1835 = vadd.f32 0.0, %v1834
        %v1836 = vpop.f32.mrb[0].mxu0
        %v1837 = vadd.f32 0.0, %v1836
        %v1838 = vpop.f32.mrb[0].mxu0
        %v1839 = vadd.f32 0.0, %v1838
        %v1840 = vpop.f32.mrb[0].mxu0
        %v1841 = vadd.f32 0.0, %v1840
        %1842 = vmatprep.mubr.bf16.mxu0 %v493
        %1843 = vmatmul.mubr.bf16.gmra.mrb[0].mxu0 %v492
        %v1844 = vpop.f32.mrb[0].mxu0
        %v1845 = vadd.f32 0.0, %v1844
        %v1846 = vpop.f32.mrb[0].mxu0
        %v1847 = vadd.f32 0.0, %v1846
        %v1848 = vpop.f32.mrb[0].mxu0
        %v1849 = vadd.f32 0.0, %v1848
        %v1850 = vpop.f32.mrb[0].mxu0
        %v1851 = vadd.f32 0.0, %v1850
        %1852 = vmatprep.mubr.bf16.mxu0 %v497
        %1853 = vmatmul.mubr.bf16.gmra.mrb[0].mxu0 %v496
        %v1854 = vpop.f32.mrb[0].mxu0
        %v1855 = vadd.f32 0.0, %v1854
        %v1856 = vpop.f32.mrb[0].mxu0
        %v1857 = vadd.f32 0.0, %v1856
        %v1858 = vpop.f32.mrb[0].mxu0
        %v1859 = vadd.f32 0.0, %v1858
        %v1860 = vpop.f32.mrb[0].mxu0
        %v1861 = vadd.f32 0.0, %v1860
        %1862 = vmatprep.mubr.bf16.mxu0 %v501
        %1863 = vmatmul.mubr.bf16.gmra.mrb[0].mxu0 %v500
        %v1864 = vpop.f32.mrb[0].mxu0
        %v1865 = vadd.f32 0.0, %v1864
        %v1866 = vpop.f32.mrb[0].mxu0
        %v1867 = vadd.f32 0.0, %v1866
        %v1868 = vpop.f32.mrb[0].mxu0
        %v1869 = vpop.f32.mrb[0].mxu0
        %1870 = vdwg.mxu0
        %1871 = vmatprep.subr.bf16.mxu0 %v1291
        %1872 = vmatpush1.bf16.xpose.msra.mxu0 %v1290
        %1873 = vmatprep.subr.bf16.mxu0 %v1295
        %1874 = vmatpush1.bf16.xpose.msra.mxu0 %v1294
        %1875 = vmatprep.subr.bf16.mxu0 %v1299
        %1876 = vmatpush1.bf16.xpose.msra.mxu0 %v1298
        %1877 = vmatprep.subr.bf16.mxu0 %v1303
        %1878 = vmatpush1.bf16.xpose.msra.mxu0 %v1302
        %1879 = vmatprep.subr.bf16.mxu0 %v1307
        %1880 = vmatpush1.bf16.xpose.msra.mxu0 %v1306
        %1881 = vmatprep.subr.bf16.mxu0 %v1311
        %1882 = vmatpush1.bf16.xpose.msra.mxu0 %v1310
        %1883 = vmatprep.subr.bf16.mxu0 %v1315
        %1884 = vmatpush1.bf16.xpose.msra.mxu0 %v1314
        %1885 = vmatprep.subr.bf16.mxu0 %v1319
        %1886 = vmatpush1.bf16.xpose.msra.mxu0 %v1318
        %1887 = vmatprep.subr.bf16.mxu0 %v1323
        %1888 = vmatpush1.bf16.xpose.msra.mxu0 %v1322
        %1889 = vmatprep.subr.bf16.mxu0 %v1327
        %1890 = vmatpush1.bf16.xpose.msra.mxu0 %v1326
        %1891 = vmatprep.subr.bf16.mxu0 %v1331
        %1892 = vmatpush1.bf16.xpose.msra.mxu0 %v1330
        %1893 = vmatprep.subr.bf16.mxu0 %v1335
        %1894 = vmatpush1.bf16.xpose.msra.mxu0 %v1334
        %1895 = vmatprep.subr.bf16.mxu0 %v1339
        %1896 = vmatpush1.bf16.xpose.msra.mxu0 %v1338
        %1897 = vmatprep.subr.bf16.mxu0 %v1343
        %1898 = vmatpush1.bf16.xpose.msra.mxu0 %v1342
        %1899 = vmatprep.subr.bf16.mxu0 %v1347
        %1900 = vmatpush1.bf16.xpose.msra.mxu0 %v1346
        %1901 = vmatprep.subr.bf16.mxu0 %v1351
        %1902 = vmatpush1.bf16.xpose.msra.mxu0 %v1350
        %1903 = vmatprep.mubr.bf16.mxu0 %v491
        %1904 = vmatmul.mubr.bf16.gmra.mrb[0].mxu0 %v490
        %v1905 = vpop.f32.mrb[0].mxu0
        %v1906 = vadd.f32 %v1835, %v1905
        %v1907 = vpop.f32.mrb[0].mxu0
        %v1908 = vadd.f32 %v1837, %v1907
        %v1909 = vpop.f32.mrb[0].mxu0
        %v1910 = vadd.f32 %v1839, %v1909
        %v1911 = vpop.f32.mrb[0].mxu0
        %v1912 = vadd.f32 %v1841, %v1911
        %1913 = vmatprep.mubr.bf16.mxu0 %v495
        %1914 = vmatmul.mubr.bf16.gmra.mrb[0].mxu0 %v494
        %v1915 = vpop.f32.mrb[0].mxu0
        %v1916 = vadd.f32 %v1845, %v1915
        %v1917 = vpop.f32.mrb[0].mxu0
        %v1918 = vadd.f32 %v1847, %v1917
        %v1919 = vpop.f32.mrb[0].mxu0
        %v1920 = vadd.f32 %v1849, %v1919
        %v1921 = vpop.f32.mrb[0].mxu0
        %v1922 = vadd.f32 %v1851, %v1921
        %1923 = vmatprep.mubr.bf16.mxu0 %v499
        %1924 = vmatmul.mubr.bf16.gmra.mrb[0].mxu0 %v498
        %v1925 = vpop.f32.mrb[0].mxu0
        %v1926 = vadd.f32 %v1855, %v1925
        %v1927 = vpop.f32.mrb[0].mxu0
        %v1928 = vadd.f32 %v1857, %v1927
        %v1929 = vpop.f32.mrb[0].mxu0
        %v1930 = vadd.f32 %v1859, %v1929
        %v1931 = vpop.f32.mrb[0].mxu0
        %v1932 = vadd.f32 %v1861, %v1931
        %1933 = vmatprep.mubr.bf16.mxu0 %v503
        %1934 = vmatmul.mubr.bf16.gmra.mrb[0].mxu0 %v502
        %v1935 = vpop.f32.mrb[0].mxu0
        %v1936 = vadd.f32 %v1865, %v1935
        %v1937 = vpop.f32.mrb[0].mxu0
        %v1938 = vadd.f32 %v1867, %v1937
        %v1939 = vpop.f32.mrb[0].mxu0
        %v1940 = vpop.f32.mrb[0].mxu0
        %1941 = vdwg.mxu0
        %1942 = vmatprep.subr.bf16.mxu0 %v1353
        %1943 = vmatpush1.bf16.xpose.msra.mxu0 %v1352
        %1944 = vmatprep.subr.bf16.mxu0 %v1357
        %1945 = vmatpush1.bf16.xpose.msra.mxu0 %v1356
        %1946 = vmatprep.subr.bf16.mxu0 %v1361
        %1947 = vmatpush1.bf16.xpose.msra.mxu0 %v1360
        %1948 = vmatprep.subr.bf16.mxu0 %v1365
        %1949 = vmatpush1.bf16.xpose.msra.mxu0 %v1364
        %1950 = vmatprep.subr.bf16.mxu0 %v1369
        %1951 = vmatpush1.bf16.xpose.msra.mxu0 %v1368
        %1952 = vmatprep.subr.bf16.mxu0 %v1373
        %1953 = vmatpush1.bf16.xpose.msra.mxu0 %v1372
        %1954 = vmatprep.subr.bf16.mxu0 %v1377
        %1955 = vmatpush1.bf16.xpose.msra.mxu0 %v1376
        %1956 = vmatprep.subr.bf16.mxu0 %v1381
        %1957 = vmatpush1.bf16.xpose.msra.mxu0 %v1380
        %1958 = vmatprep.subr.bf16.mxu0 %v1385
        %1959 = vmatpush1.bf16.xpose.msra.mxu0 %v1384
        %1960 = vmatprep.subr.bf16.mxu0 %v1389
        %1961 = vmatpush1.bf16.xpose.msra.mxu0 %v1388
        %1962 = vmatprep.subr.bf16.mxu0 %v1393
        %1963 = vmatpush1.bf16.xpose.msra.mxu0 %v1392
        %1964 = vmatprep.subr.bf16.mxu0 %v1397
        %1965 = vmatpush1.bf16.xpose.msra.mxu0 %v1396
        %1966 = vmatprep.subr.bf16.mxu0 %v1401
        %1967 = vmatpush1.bf16.xpose.msra.mxu0 %v1400
        %1968 = vmatprep.subr.bf16.mxu0 %v1405
        %1969 = vmatpush1.bf16.xpose.msra.mxu0 %v1404
        %1970 = vmatprep.subr.bf16.mxu0 %v1409
        %1971 = vmatpush1.bf16.xpose.msra.mxu0 %v1408
        %1972 = vmatprep.subr.bf16.mxu0 %v1413
        %1973 = vmatpush1.bf16.xpose.msra.mxu0 %v1412
        %1974 = vmatprep.mubr.bf16.mxu0 %v489
        %1975 = vmatmul.mubr.bf16.gmra.mrb[0].mxu0 %v488
        %v1976 = vpop.f32.mrb[0].mxu0
        %v1977 = vadd.f32 0.0, %v1976
        %v1978 = vpop.f32.mrb[0].mxu0
        %v1979 = vadd.f32 0.0, %v1978
        %v1980 = vpop.f32.mrb[0].mxu0
        %v1981 = vadd.f32 0.0, %v1980
        %v1982 = vpop.f32.mrb[0].mxu0
        %v1983 = vadd.f32 0.0, %v1982
        %1984 = vmatprep.mubr.bf16.mxu0 %v493
        %1985 = vmatmul.mubr.bf16.gmra.mrb[0].mxu0 %v492
        %v1986 = vpop.f32.mrb[0].mxu0
        %v1987 = vadd.f32 0.0, %v1986
        %v1988 = vpop.f32.mrb[0].mxu0
        %v1989 = vadd.f32 0.0, %v1988
        %v1990 = vpop.f32.mrb[0].mxu0
        %v1991 = vadd.f32 0.0, %v1990
        %v1992 = vpop.f32.mrb[0].mxu0
        %v1993 = vadd.f32 0.0, %v1992
        %1994 = vmatprep.mubr.bf16.mxu0 %v497
        %1995 = vmatmul.mubr.bf16.gmra.mrb[0].mxu0 %v496
        %v1996 = vpop.f32.mrb[0].mxu0
        %v1997 = vadd.f32 0.0, %v1996
        %v1998 = vpop.f32.mrb[0].mxu0
        %v1999 = vadd.f32 0.0, %v1998
        %v2000 = vpop.f32.mrb[0].mxu0
        %v2001 = vadd.f32 0.0, %v2000
        %v2002 = vpop.f32.mrb[0].mxu0
        %v2003 = vadd.f32 0.0, %v2002
        %2004 = vmatprep.mubr.bf16.mxu0 %v501
        %2005 = vmatmul.mubr.bf16.gmra.mrb[0].mxu0 %v500
        %v2006 = vpop.f32.mrb[0].mxu0
        %v2007 = vadd.f32 0.0, %v2006
        %v2008 = vpop.f32.mrb[0].mxu0
        %v2009 = vadd.f32 0.0, %v2008
        %v2010 = vpop.f32.mrb[0].mxu0
        %v2011 = vpop.f32.mrb[0].mxu0
        %2012 = vdwg.mxu0
        %2013 = vmatprep.subr.bf16.mxu0 %v1355
        %2014 = vmatpush1.bf16.xpose.msra.mxu0 %v1354
        %2015 = vmatprep.subr.bf16.mxu0 %v1359
        %2016 = vmatpush1.bf16.xpose.msra.mxu0 %v1358
        %2017 = vmatprep.subr.bf16.mxu0 %v1363
        %2018 = vmatpush1.bf16.xpose.msra.mxu0 %v1362
        %2019 = vmatprep.subr.bf16.mxu0 %v1367
        %2020 = vmatpush1.bf16.xpose.msra.mxu0 %v1366
        %2021 = vmatprep.subr.bf16.mxu0 %v1371
        %2022 = vmatpush1.bf16.xpose.msra.mxu0 %v1370
        %2023 = vmatprep.subr.bf16.mxu0 %v1375
        %2024 = vmatpush1.bf16.xpose.msra.mxu0 %v1374
        %2025 = vmatprep.subr.bf16.mxu0 %v1379
        %2026 = vmatpush1.bf16.xpose.msra.mxu0 %v1378
        %2027 = vmatprep.subr.bf16.mxu0 %v1383
        %2028 = vmatpush1.bf16.xpose.msra.mxu0 %v1382
        %2029 = vmatprep.subr.bf16.mxu0 %v1387
        %2030 = vmatpush1.bf16.xpose.msra.mxu0 %v1386
        %2031 = vmatprep.subr.bf16.mxu0 %v1391
        %2032 = vmatpush1.bf16.xpose.msra.mxu0 %v1390
        %2033 = vmatprep.subr.bf16.mxu0 %v1395
        %2034 = vmatpush1.bf16.xpose.msra.mxu0 %v1394
        %2035 = vmatprep.subr.bf16.mxu0 %v1399
        %2036 = vmatpush1.bf16.xpose.msra.mxu0 %v1398
        %2037 = vmatprep.subr.bf16.mxu0 %v1403
        %2038 = vmatpush1.bf16.xpose.msra.mxu0 %v1402
        %2039 = vmatprep.subr.bf16.mxu0 %v1407
        %2040 = vmatpush1.bf16.xpose.msra.mxu0 %v1406
        %2041 = vmatprep.subr.bf16.mxu0 %v1411
        %2042 = vmatpush1.bf16.xpose.msra.mxu0 %v1410
        %2043 = vmatprep.subr.bf16.mxu0 %v1415
        %2044 = vmatpush1.bf16.xpose.msra.mxu0 %v1414
        %2045 = vmatprep.mubr.bf16.mxu0 %v491
        %2046 = vmatmul.mubr.bf16.gmra.mrb[0].mxu0 %v490
        %v2047 = vpop.f32.mrb[0].mxu0
        %v2048 = vadd.f32 %v1977, %v2047
        %v2049 = vpop.f32.mrb[0].mxu0
        %v2050 = vadd.f32 %v1979, %v2049
        %v2051 = vpop.f32.mrb[0].mxu0
        %v2052 = vadd.f32 %v1981, %v2051
        %v2053 = vpop.f32.mrb[0].mxu0
        %v2054 = vadd.f32 %v1983, %v2053
        %2055 = vmatprep.mubr.bf16.mxu0 %v495
        %2056 = vmatmul.mubr.bf16.gmra.mrb[0].mxu0 %v494
        %v2057 = vpop.f32.mrb[0].mxu0
        %v2058 = vadd.f32 %v1987, %v2057
        %v2059 = vpop.f32.mrb[0].mxu0
        %v2060 = vadd.f32 %v1989, %v2059
        %v2061 = vpop.f32.mrb[0].mxu0
        %v2062 = vadd.f32 %v1991, %v2061
        %v2063 = vpop.f32.mrb[0].mxu0
        %v2064 = vadd.f32 %v1993, %v2063
        %2065 = vmatprep.mubr.bf16.mxu0 %v499
        %2066 = vmatmul.mubr.bf16.gmra.mrb[0].mxu0 %v498
        %v2067 = vpop.f32.mrb[0].mxu0
        %v2068 = vadd.f32 %v1997, %v2067
        %v2069 = vpop.f32.mrb[0].mxu0
        %v2070 = vadd.f32 %v1999, %v2069
        %v2071 = vpop.f32.mrb[0].mxu0
        %v2072 = vadd.f32 %v2001, %v2071
        %v2073 = vpop.f32.mrb[0].mxu0
        %v2074 = vadd.f32 %v2003, %v2073
        %2075 = vmatprep.mubr.bf16.mxu0 %v503
        %2076 = vmatmul.mubr.bf16.gmra.mrb[0].mxu0 %v502
        %v2077 = vpop.f32.mrb[0].mxu0
        %v2078 = vadd.f32 %v2007, %v2077
        %v2079 = vpop.f32.mrb[0].mxu0
        %v2080 = vadd.f32 %v2009, %v2079
        %v2081 = vpop.f32.mrb[0].mxu0
        %v2082 = vpop.f32.mrb[0].mxu0
        %2083 = vdwg.mxu0
        %2084 = vmatprep.subr.bf16.mxu0 %v1417
        %2085 = vmatpush1.bf16.xpose.msra.mxu0 %v1416
        %2086 = vmatprep.subr.bf16.mxu0 %v1421
        %2087 = vmatpush1.bf16.xpose.msra.mxu0 %v1420
        %2088 = vmatprep.subr.bf16.mxu0 %v1425
        %2089 = vmatpush1.bf16.xpose.msra.mxu0 %v1424
        %2090 = vmatprep.subr.bf16.mxu0 %v1429
        %2091 = vmatpush1.bf16.xpose.msra.mxu0 %v1428
        %2092 = vmatprep.subr.bf16.mxu0 %v1433
        %2093 = vmatpush1.bf16.xpose.msra.mxu0 %v1432
        %2094 = vmatprep.subr.bf16.mxu0 %v1437
        %2095 = vmatpush1.bf16.xpose.msra.mxu0 %v1436
        %2096 = vmatprep.subr.bf16.mxu0 %v1441
        %2097 = vmatpush1.bf16.xpose.msra.mxu0 %v1440
        %2098 = vmatprep.subr.bf16.mxu0 %v1445
        %2099 = vmatpush1.bf16.xpose.msra.mxu0 %v1444
        %2100 = vmatprep.subr.bf16.mxu0 %v1449
        %2101 = vmatpush1.bf16.xpose.msra.mxu0 %v1448
        %2102 = vmatprep.subr.bf16.mxu0 %v1453
        %2103 = vmatpush1.bf16.xpose.msra.mxu0 %v1452
        %2104 = vmatprep.subr.bf16.mxu0 %v1457
        %2105 = vmatpush1.bf16.xpose.msra.mxu0 %v1456
        %2106 = vmatprep.subr.bf16.mxu0 %v1461
        %2107 = vmatpush1.bf16.xpose.msra.mxu0 %v1460
        %2108 = vmatprep.subr.bf16.mxu0 %v1465
        %2109 = vmatpush1.bf16.xpose.msra.mxu0 %v1464
        %2110 = vmatprep.subr.bf16.mxu0 %v1469
        %2111 = vmatpush1.bf16.xpose.msra.mxu0 %v1468
        %2112 = vmatprep.subr.bf16.mxu0 %v1473
        %2113 = vmatpush1.bf16.xpose.msra.mxu0 %v1472
        %2114 = vmatprep.subr.bf16.mxu0 %v1477
        %2115 = vmatpush1.bf16.xpose.msra.mxu0 %v1476
        %2116 = vmatprep.mubr.bf16.mxu0 %v489
        %2117 = vmatmul.mubr.bf16.gmra.mrb[0].mxu0 %v488
        %v2118 = vpop.f32.mrb[0].mxu0
        %v2119 = vadd.f32 0.0, %v2118
        %v2120 = vpop.f32.mrb[0].mxu0
        %v2121 = vadd.f32 0.0, %v2120
        %v2122 = vpop.f32.mrb[0].mxu0
        %v2123 = vadd.f32 0.0, %v2122
        %v2124 = vpop.f32.mrb[0].mxu0
        %v2125 = vadd.f32 0.0, %v2124
        %2126 = vmatprep.mubr.bf16.mxu0 %v493
        %2127 = vmatmul.mubr.bf16.gmra.mrb[0].mxu0 %v492
        %v2128 = vpop.f32.mrb[0].mxu0
        %v2129 = vadd.f32 0.0, %v2128
        %v2130 = vpop.f32.mrb[0].mxu0
        %v2131 = vadd.f32 0.0, %v2130
        %v2132 = vpop.f32.mrb[0].mxu0
        %v2133 = vadd.f32 0.0, %v2132
        %v2134 = vpop.f32.mrb[0].mxu0
        %v2135 = vadd.f32 0.0, %v2134
        %2136 = vmatprep.mubr.bf16.mxu0 %v497
        %2137 = vmatmul.mubr.bf16.gmra.mrb[0].mxu0 %v496
        %v2138 = vpop.f32.mrb[0].mxu0
        %v2139 = vadd.f32 0.0, %v2138
        %v2140 = vpop.f32.mrb[0].mxu0
        %v2141 = vadd.f32 0.0, %v2140
        %v2142 = vpop.f32.mrb[0].mxu0
        %v2143 = vadd.f32 0.0, %v2142
        %v2144 = vpop.f32.mrb[0].mxu0
        %v2145 = vadd.f32 0.0, %v2144
        %2146 = vmatprep.mubr.bf16.mxu0 %v501
        %2147 = vmatmul.mubr.bf16.gmra.mrb[0].mxu0 %v500
        %v2148 = vpop.f32.mrb[0].mxu0
        %v2149 = vadd.f32 0.0, %v2148
        %v2150 = vpop.f32.mrb[0].mxu0
        %v2151 = vadd.f32 0.0, %v2150
        %v2152 = vpop.f32.mrb[0].mxu0
        %v2153 = vpop.f32.mrb[0].mxu0
        %2154 = vdwg.mxu0
        %2155 = vmatprep.subr.bf16.mxu0 %v1419
        %2156 = vmatpush1.bf16.xpose.msra.mxu0 %v1418
        %2157 = vmatprep.subr.bf16.mxu0 %v1423
        %2158 = vmatpush1.bf16.xpose.msra.mxu0 %v1422
        %2159 = vmatprep.subr.bf16.mxu0 %v1427
        %2160 = vmatpush1.bf16.xpose.msra.mxu0 %v1426
        %2161 = vmatprep.subr.bf16.mxu0 %v1431
        %2162 = vmatpush1.bf16.xpose.msra.mxu0 %v1430
        %2163 = vmatprep.subr.bf16.mxu0 %v1435
        %2164 = vmatpush1.bf16.xpose.msra.mxu0 %v1434
        %2165 = vmatprep.subr.bf16.mxu0 %v1439
        %2166 = vmatpush1.bf16.xpose.msra.mxu0 %v1438
        %2167 = vmatprep.subr.bf16.mxu0 %v1443
        %2168 = vmatpush1.bf16.xpose.msra.mxu0 %v1442
        %2169 = vmatprep.subr.bf16.mxu0 %v1447
        %2170 = vmatpush1.bf16.xpose.msra.mxu0 %v1446
        %2171 = vmatprep.subr.bf16.mxu0 %v1451
        %2172 = vmatpush1.bf16.xpose.msra.mxu0 %v1450
        %2173 = vmatprep.subr.bf16.mxu0 %v1455
        %2174 = vmatpush1.bf16.xpose.msra.mxu0 %v1454
        %2175 = vmatprep.subr.bf16.mxu0 %v1459
        %2176 = vmatpush1.bf16.xpose.msra.mxu0 %v1458
        %2177 = vmatprep.subr.bf16.mxu0 %v1463
        %2178 = vmatpush1.bf16.xpose.msra.mxu0 %v1462
        %2179 = vmatprep.subr.bf16.mxu0 %v1467
        %2180 = vmatpush1.bf16.xpose.msra.mxu0 %v1466
        %2181 = vmatprep.subr.bf16.mxu0 %v1471
        %2182 = vmatpush1.bf16.xpose.msra.mxu0 %v1470
        %2183 = vmatprep.subr.bf16.mxu0 %v1475
        %2184 = vmatpush1.bf16.xpose.msra.mxu0 %v1474
        %2185 = vmatprep.subr.bf16.mxu0 %v1479
        %2186 = vmatpush1.bf16.xpose.msra.mxu0 %v1478
        %2187 = vmatprep.mubr.bf16.mxu0 %v491
        %2188 = vmatmul.mubr.bf16.gmra.mrb[0].mxu0 %v490
        %v2189 = vpop.f32.mrb[0].mxu0
        %v2190 = vadd.f32 %v2119, %v2189
        %v2191 = vpop.f32.mrb[0].mxu0
        %v2192 = vadd.f32 %v2121, %v2191
        %v2193 = vpop.f32.mrb[0].mxu0
        %v2194 = vadd.f32 %v2123, %v2193
        %v2195 = vpop.f32.mrb[0].mxu0
        %v2196 = vadd.f32 %v2125, %v2195
        %2197 = vmatprep.mubr.bf16.mxu0 %v495
        %2198 = vmatmul.mubr.bf16.gmra.mrb[0].mxu0 %v494
        %v2199 = vpop.f32.mrb[0].mxu0
        %v2200 = vadd.f32 %v2129, %v2199
        %v2201 = vpop.f32.mrb[0].mxu0
        %v2202 = vadd.f32 %v2131, %v2201
        %v2203 = vpop.f32.mrb[0].mxu0
        %v2204 = vadd.f32 %v2133, %v2203
        %v2205 = vpop.f32.mrb[0].mxu0
        %v2206 = vadd.f32 %v2135, %v2205
        %2207 = vmatprep.mubr.bf16.mxu0 %v499
        %2208 = vmatmul.mubr.bf16.gmra.mrb[0].mxu0 %v498
        %v2209 = vpop.f32.mrb[0].mxu0
        %v2210 = vadd.f32 %v2139, %v2209
        %v2211 = vpop.f32.mrb[0].mxu0
        %v2212 = vadd.f32 %v2141, %v2211
        %v2213 = vpop.f32.mrb[0].mxu0
        %v2214 = vadd.f32 %v2143, %v2213
        %v2215 = vpop.f32.mrb[0].mxu0
        %v2216 = vadd.f32 %v2145, %v2215
        %2217 = vmatprep.mubr.bf16.mxu0 %v503
        %2218 = vmatmul.mubr.bf16.gmra.mrb[0].mxu0 %v502
        %v2219 = vpop.f32.mrb[0].mxu0
        %v2220 = vadd.f32 %v2149, %v2219
        %v2221 = vpop.f32.mrb[0].mxu0
        %v2222 = vadd.f32 %v2151, %v2221
        %v2223 = vpop.f32.mrb[0].mxu0
        %v2224 = vpop.f32.mrb[0].mxu0
        %2225 = vdwg.mxu0
        %2226 = vmatprep.subr.bf16.mxu0 %v1481
        %2227 = vmatpush1.bf16.xpose.msra.mxu0 %v1480
        %2228 = vmatprep.subr.bf16.mxu0 %v1485
        %2229 = vmatpush1.bf16.xpose.msra.mxu0 %v1484
        %2230 = vmatprep.subr.bf16.mxu0 %v1489
        %2231 = vmatpush1.bf16.xpose.msra.mxu0 %v1488
        %2232 = vmatprep.subr.bf16.mxu0 %v1493
        %2233 = vmatpush1.bf16.xpose.msra.mxu0 %v1492
        %2234 = vmatprep.subr.bf16.mxu0 %v1497
        %2235 = vmatpush1.bf16.xpose.msra.mxu0 %v1496
        %2236 = vmatprep.subr.bf16.mxu0 %v1501
        %2237 = vmatpush1.bf16.xpose.msra.mxu0 %v1500
        %2238 = vmatprep.subr.bf16.mxu0 %v1505
        %2239 = vmatpush1.bf16.xpose.msra.mxu0 %v1504
        %2240 = vmatprep.subr.bf16.mxu0 %v1509
        %2241 = vmatpush1.bf16.xpose.msra.mxu0 %v1508
        %2242 = vmatprep.subr.bf16.mxu0 %v1513
        %2243 = vmatpush1.bf16.xpose.msra.mxu0 %v1512
        %2244 = vmatprep.subr.bf16.mxu0 %v1517
        %2245 = vmatpush1.bf16.xpose.msra.mxu0 %v1516
        %2246 = vmatprep.subr.bf16.mxu0 %v1521
        %2247 = vmatpush1.bf16.xpose.msra.mxu0 %v1520
        %2248 = vmatprep.subr.bf16.mxu0 %v1525
        %2249 = vmatpush1.bf16.xpose.msra.mxu0 %v1524
        %2250 = vmatprep.subr.bf16.mxu0 %v1529
        %2251 = vmatpush1.bf16.xpose.msra.mxu0 %v1528
        %2252 = vmatprep.subr.bf16.mxu0 %v1533
        %2253 = vmatpush1.bf16.xpose.msra.mxu0 %v1532
        %2254 = vmatprep.subr.bf16.mxu0 %v1537
        %2255 = vmatpush1.bf16.xpose.msra.mxu0 %v1536
        %2256 = vmatprep.subr.bf16.mxu0 %v1541
        %2257 = vmatpush1.bf16.xpose.msra.mxu0 %v1540
        %2258 = vmatprep.mubr.bf16.mxu0 %v489
        %2259 = vmatmul.mubr.bf16.gmra.mrb[0].mxu0 %v488
        %v2260 = vpop.f32.mrb[0].mxu0
        %v2261 = vadd.f32 0.0, %v2260
        %v2262 = vpop.f32.mrb[0].mxu0
        %v2263 = vadd.f32 0.0, %v2262
        %v2264 = vpop.f32.mrb[0].mxu0
        %v2265 = vadd.f32 0.0, %v2264
        %v2266 = vpop.f32.mrb[0].mxu0
        %v2267 = vadd.f32 0.0, %v2266
        %2268 = vmatprep.mubr.bf16.mxu0 %v493
        %2269 = vmatmul.mubr.bf16.gmra.mrb[0].mxu0 %v492
        %v2270 = vpop.f32.mrb[0].mxu0
        %v2271 = vadd.f32 0.0, %v2270
        %v2272 = vpop.f32.mrb[0].mxu0
        %v2273 = vadd.f32 0.0, %v2272
        %v2274 = vpop.f32.mrb[0].mxu0
        %v2275 = vadd.f32 0.0, %v2274
        %v2276 = vpop.f32.mrb[0].mxu0
        %v2277 = vadd.f32 0.0, %v2276
        %2278 = vmatprep.mubr.bf16.mxu0 %v497
        %2279 = vmatmul.mubr.bf16.gmra.mrb[0].mxu0 %v496
        %v2280 = vpop.f32.mrb[0].mxu0
        %v2281 = vadd.f32 0.0, %v2280
        %v2282 = vpop.f32.mrb[0].mxu0
        %v2283 = vadd.f32 0.0, %v2282
        %v2284 = vpop.f32.mrb[0].mxu0
        %v2285 = vadd.f32 0.0, %v2284
        %v2286 = vpop.f32.mrb[0].mxu0
        %v2287 = vadd.f32 0.0, %v2286
        %2288 = vmatprep.mubr.bf16.mxu0 %v501
        %2289 = vmatmul.mubr.bf16.gmra.mrb[0].mxu0 %v500
        %v2290 = vpop.f32.mrb[0].mxu0
        %v2291 = vadd.f32 0.0, %v2290
        %v2292 = vpop.f32.mrb[0].mxu0
        %v2293 = vadd.f32 0.0, %v2292
        %v2294 = vpop.f32.mrb[0].mxu0
        %v2295 = vpop.f32.mrb[0].mxu0
        %2296 = vdwg.mxu0
        %2297 = vmatprep.subr.bf16.mxu0 %v1483
        %2298 = vmatpush1.bf16.xpose.msra.mxu0 %v1482
        %2299 = vmatprep.subr.bf16.mxu0 %v1487
        %2300 = vmatpush1.bf16.xpose.msra.mxu0 %v1486
        %2301 = vmatprep.subr.bf16.mxu0 %v1491
        %2302 = vmatpush1.bf16.xpose.msra.mxu0 %v1490
        %2303 = vmatprep.subr.bf16.mxu0 %v1495
        %2304 = vmatpush1.bf16.xpose.msra.mxu0 %v1494
        %2305 = vmatprep.subr.bf16.mxu0 %v1499
        %2306 = vmatpush1.bf16.xpose.msra.mxu0 %v1498
        %2307 = vmatprep.subr.bf16.mxu0 %v1503
        %2308 = vmatpush1.bf16.xpose.msra.mxu0 %v1502
        %2309 = vmatprep.subr.bf16.mxu0 %v1507
        %2310 = vmatpush1.bf16.xpose.msra.mxu0 %v1506
        %2311 = vmatprep.subr.bf16.mxu0 %v1511
        %2312 = vmatpush1.bf16.xpose.msra.mxu0 %v1510
        %2313 = vmatprep.subr.bf16.mxu0 %v1515
        %2314 = vmatpush1.bf16.xpose.msra.mxu0 %v1514
        %2315 = vmatprep.subr.bf16.mxu0 %v1519
        %2316 = vmatpush1.bf16.xpose.msra.mxu0 %v1518
        %2317 = vmatprep.subr.bf16.mxu0 %v1523
        %2318 = vmatpush1.bf16.xpose.msra.mxu0 %v1522
        %2319 = vmatprep.subr.bf16.mxu0 %v1527
        %2320 = vmatpush1.bf16.xpose.msra.mxu0 %v1526
        %2321 = vmatprep.subr.bf16.mxu0 %v1531
        %2322 = vmatpush1.bf16.xpose.msra.mxu0 %v1530
        %2323 = vmatprep.subr.bf16.mxu0 %v1535
        %2324 = vmatpush1.bf16.xpose.msra.mxu0 %v1534
        %2325 = vmatprep.subr.bf16.mxu0 %v1539
        %2326 = vmatpush1.bf16.xpose.msra.mxu0 %v1538
        %2327 = vmatprep.subr.bf16.mxu0 %v1543
        %2328 = vmatpush1.bf16.xpose.msra.mxu0 %v1542
        %2329 = vmatprep.mubr.bf16.mxu0 %v491
        %2330 = vmatmul.mubr.bf16.gmra.mrb[0].mxu0 %v490
        %v2331 = vpop.f32.mrb[0].mxu0
        %v2332 = vadd.f32 %v2261, %v2331
        %v2333 = vpop.f32.mrb[0].mxu0
        %v2334 = vadd.f32 %v2263, %v2333
        %v2335 = vpop.f32.mrb[0].mxu0
        %v2336 = vadd.f32 %v2265, %v2335
        %v2337 = vpop.f32.mrb[0].mxu0
        %v2338 = vadd.f32 %v2267, %v2337
        %2339 = vmatprep.mubr.bf16.mxu0 %v495
        %2340 = vmatmul.mubr.bf16.gmra.mrb[0].mxu0 %v494
        %v2341 = vpop.f32.mrb[0].mxu0
        %v2342 = vadd.f32 %v2271, %v2341
        %v2343 = vpop.f32.mrb[0].mxu0
        %v2344 = vadd.f32 %v2273, %v2343
        %v2345 = vpop.f32.mrb[0].mxu0
        %v2346 = vadd.f32 %v2275, %v2345
        %v2347 = vpop.f32.mrb[0].mxu0
        %v2348 = vadd.f32 %v2277, %v2347
        %2349 = vmatprep.mubr.bf16.mxu0 %v499
        %2350 = vmatmul.mubr.bf16.gmra.mrb[0].mxu0 %v498
        %v2351 = vpop.f32.mrb[0].mxu0
        %v2352 = vadd.f32 %v2281, %v2351
        %v2353 = vpop.f32.mrb[0].mxu0
        %v2354 = vadd.f32 %v2283, %v2353
        %v2355 = vpop.f32.mrb[0].mxu0
        %v2356 = vadd.f32 %v2285, %v2355
        %v2357 = vpop.f32.mrb[0].mxu0
        %v2358 = vadd.f32 %v2287, %v2357
        %2359 = vmatprep.mubr.bf16.mxu0 %v503
        %2360 = vmatmul.mubr.bf16.gmra.mrb[0].mxu0 %v502
        %v2361 = vpop.f32.mrb[0].mxu0
        %v2362 = vadd.f32 %v2291, %v2361
        %v2363 = vpop.f32.mrb[0].mxu0
        %v2364 = vadd.f32 %v2293, %v2363
        %v2365 = vpop.f32.mrb[0].mxu0
        %v2366 = vpop.f32.mrb[0].mxu0
        %2367 = vdwg.mxu0
        %2368 = vst [vmem:[%s158] sm:$0xff] %v1906
        %2369 = vst [vmem:[%s158 + $0x8] sm:$0xff] %v1908
        %2370 = vst [vmem:[%s158 + $0x10] sm:$0xff] %v2048
        %2371 = vst [vmem:[%s158 + $0x18] sm:$0xff] %v2050
        %2372 = vst [vmem:[%s158 + $0x20] sm:$0xff] %v2190
        %2373 = vst [vmem:[%s158 + $0x28] sm:$0xff] %v2192
        %2374 = vst [vmem:[%s158 + $0x30] sm:$0xff] %v2332
        %2375 = vst [vmem:[%s158 + $0x38] sm:$0xff] %v2334
        %2376 = vst [vmem:[%s158 + $0x40] sm:$0xff] %v1910
        %2377 = vst [vmem:[%s158 + $0x48] sm:$0xff] %v1912
        %2378 = vst [vmem:[%s158 + $0x50] sm:$0xff] %v2052
        %2379 = vst [vmem:[%s158 + $0x58] sm:$0xff] %v2054
        %2380 = vst [vmem:[%s158 + $0x60] sm:$0xff] %v2194
        %2381 = vst [vmem:[%s158 + $0x68] sm:$0xff] %v2196
        %2382 = vst [vmem:[%s158 + $0x70] sm:$0xff] %v2336
        %2383 = vst [vmem:[%s158 + $0x78] sm:$0xff] %v2338
        %2384 = vst [vmem:[%s158 + $0x80] sm:$0xff] %v1916
        %2385 = vst [vmem:[%s158 + $0x88] sm:$0xff] %v1918
        %2386 = vst [vmem:[%s158 + $0x90] sm:$0xff] %v2058
        %2387 = vst [vmem:[%s158 + $0x98] sm:$0xff] %v2060
        %2388 = vst [vmem:[%s158 + $0xa0] sm:$0xff] %v2200
        %2389 = vst [vmem:[%s158 + $0xa8] sm:$0xff] %v2202
        %2390 = vst [vmem:[%s158 + $0xb0] sm:$0xff] %v2342
        %2391 = vst [vmem:[%s158 + $0xb8] sm:$0xff] %v2344
        %2392 = vst [vmem:[%s158 + $0xc0] sm:$0xff] %v1920
        %2393 = vst [vmem:[%s158 + $0xc8] sm:$0xff] %v1922
        %2394 = vst [vmem:[%s158 + $0xd0] sm:$0xff] %v2062
        %2395 = vst [vmem:[%s158 + $0xd8] sm:$0xff] %v2064
        %2396 = vst [vmem:[%s158 + $0xe0] sm:$0xff] %v2204
        %2397 = vst [vmem:[%s158 + $0xe8] sm:$0xff] %v2206
        %2398 = vst [vmem:[%s158 + $0xf0] sm:$0xff] %v2346
        %2399 = vst [vmem:[%s158 + $0xf8] sm:$0xff] %v2348
        %2400 = vst [vmem:[%s158 + $0x100] sm:$0xff] %v1926
        %2401 = vst [vmem:[%s158 + $0x108] sm:$0xff] %v1928
        %2402 = vst [vmem:[%s158 + $0x110] sm:$0xff] %v2068
        %2403 = vst [vmem:[%s158 + $0x118] sm:$0xff] %v2070
        %2404 = vst [vmem:[%s158 + $0x120] sm:$0xff] %v2210
        %2405 = vst [vmem:[%s158 + $0x128] sm:$0xff] %v2212
        %2406 = vst [vmem:[%s158 + $0x130] sm:$0xff] %v2352
        %2407 = vst [vmem:[%s158 + $0x138] sm:$0xff] %v2354
        %2408 = vst [vmem:[%s158 + $0x140] sm:$0xff] %v1930
        %2409 = vst [vmem:[%s158 + $0x148] sm:$0xff] %v1932
        %2410 = vst [vmem:[%s158 + $0x150] sm:$0xff] %v2072
        %2411 = vst [vmem:[%s158 + $0x158] sm:$0xff] %v2074
        %2412 = vst [vmem:[%s158 + $0x160] sm:$0xff] %v2214
        %2413 = vst [vmem:[%s158 + $0x168] sm:$0xff] %v2216
        %2414 = vst [vmem:[%s158 + $0x170] sm:$0xff] %v2356
        %2415 = vst [vmem:[%s158 + $0x178] sm:$0xff] %v2358
        %2416 = vst [vmem:[%s158 + $0x180] sm:$0xff] %v1936
        %2417 = vst [vmem:[%s158 + $0x188] sm:$0xff] %v1938
        %2418 = vst [vmem:[%s158 + $0x190] sm:$0xff] %v2078
        %2419 = vst [vmem:[%s158 + $0x198] sm:$0xff] %v2080
        %2420 = vst [vmem:[%s158 + $0x1a0] sm:$0xff] %v2220
        %2421 = vst [vmem:[%s158 + $0x1a8] sm:$0xff] %v2222
        %2422 = vst [vmem:[%s158 + $0x1b0] sm:$0xff] %v2362
        %2423 = vst [vmem:[%s158 + $0x1b8] sm:$0xff] %v2364
        %s2424 = sand.u32 %s71, 1
        %s2425 = sand.u32 %s71, 1
        %s2426 = smul.addr %s2425, 448
        %s2427 = scalar_lea.vmem [#allocation4], %s2426
        // Predicated region
        $region33: #{relu_conv1x1.1} parent=27 // pred_check
          %p2428 = pneg %p81
        $region34: #{relu_conv1x1.1} parent=27 // pred_check_branch
          %2430 = sbr.rel (%p2428) target = $region36
        $region35: #{relu_conv1x1.1} parent=27 // pred_region
          %s2431 = smul.u32 8, %s16
          %s2432 = smul.addr %s2431, 8
          %s2433 = scalar_lea.vmem %s2, %s2432
          // Predicated region
          $region37: #{relu_conv1x1.1} parent=35 // pred_check
            _
          $region38: #{relu_conv1x1.1} parent=35 // pred_check_branch
            %2435 = sbr.rel (0) target = $region40
          $region39: #{relu_conv1x1.1} parent=35 // pred_region
            // Predicated region
            $region41: #{relu_conv1x1.1} parent=39 // pred_check
              _
            $region42: #{relu_conv1x1.1} parent=39 // pred_check_branch
              %2437 = sbr.rel (0) target = $region44
            $region43: #{relu_conv1x1.1} parent=39 // pred_region
              loop: start=0, step=1, limit=1
              $region45: #{relu_conv1x1.1} parent=43 // loop_pre_header
                _
              $region46: #{relu_conv1x1.1} parent=43 // loop_header
                %s2439 = sphi 0, %s2443
                %p2440 = scmp.ge.s32.totalorder %s2439, 1
                %s2444 = sphi %s2427, %s2427
                %s2445 = sphi %s2433, %s2433
              $region47: #{relu_conv1x1.1} parent=43 // loop_header_branch
                %2442 = sbr.rel (%p2440) target = $region51
              $region48: #{relu_conv1x1.1} parent=43 // loop_body
                %v2446 = vld [vmem:[%s2444] sm:$0xff]
                %2447 = vst [vmem:[%s2445] sm:$0xff] %v2446
                %v2448 = vld [vmem:[%s2444 + $0x8] sm:$0xff]
                %2449 = vst [vmem:[%s2445 + $0x8] sm:$0xff] %v2448
                %v2450 = vld [vmem:[%s2444 + $0x10] sm:$0xff]
                %2451 = vst [vmem:[%s2445 + $0x10] sm:$0xff] %v2450
                %v2452 = vld [vmem:[%s2444 + $0x18] sm:$0xff]
                %2453 = vst [vmem:[%s2445 + $0x18] sm:$0xff] %v2452
                %v2454 = vld [vmem:[%s2444 + $0x20] sm:$0xff]
                %2455 = vst [vmem:[%s2445 + $0x20] sm:$0xff] %v2454
                %v2456 = vld [vmem:[%s2444 + $0x28] sm:$0xff]
                %2457 = vst [vmem:[%s2445 + $0x28] sm:$0xff] %v2456
                %v2458 = vld [vmem:[%s2444 + $0x30] sm:$0xff]
                %2459 = vst [vmem:[%s2445 + $0x30] sm:$0xff] %v2458
                %v2460 = vld [vmem:[%s2444 + $0x38] sm:$0xff]
                %2461 = vst [vmem:[%s2445 + $0x38] sm:$0xff] %v2460
                %v2462 = vld [vmem:[%s2444 + $0x40] sm:$0xff]
                %2463 = vst [vmem:[%s2445 + $0x80] sm:$0xff] %v2462
                %v2464 = vld [vmem:[%s2444 + $0x48] sm:$0xff]
                %2465 = vst [vmem:[%s2445 + $0x88] sm:$0xff] %v2464
                %v2466 = vld [vmem:[%s2444 + $0x50] sm:$0xff]
                %2467 = vst [vmem:[%s2445 + $0x90] sm:$0xff] %v2466
                %v2468 = vld [vmem:[%s2444 + $0x58] sm:$0xff]
                %2469 = vst [vmem:[%s2445 + $0x98] sm:$0xff] %v2468
                %v2470 = vld [vmem:[%s2444 + $0x60] sm:$0xff]
                %2471 = vst [vmem:[%s2445 + $0xa0] sm:$0xff] %v2470
                %v2472 = vld [vmem:[%s2444 + $0x68] sm:$0xff]
                %2473 = vst [vmem:[%s2445 + $0xa8] sm:$0xff] %v2472
                %v2474 = vld [vmem:[%s2444 + $0x70] sm:$0xff]
                %2475 = vst [vmem:[%s2445 + $0xb0] sm:$0xff] %v2474
                %v2476 = vld [vmem:[%s2444 + $0x78] sm:$0xff]
                %2477 = vst [vmem:[%s2445 + $0xb8] sm:$0xff] %v2476
                %v2478 = vld [vmem:[%s2444 + $0x80] sm:$0xff]
                %2479 = vst [vmem:[%s2445 + $0x100] sm:$0xff] %v2478
                %v2480 = vld [vmem:[%s2444 + $0x88] sm:$0xff]
                %2481 = vst [vmem:[%s2445 + $0x108] sm:$0xff] %v2480
                %v2482 = vld [vmem:[%s2444 + $0x90] sm:$0xff]
                %2483 = vst [vmem:[%s2445 + $0x110] sm:$0xff] %v2482
                %v2484 = vld [vmem:[%s2444 + $0x98] sm:$0xff]
                %2485 = vst [vmem:[%s2445 + $0x118] sm:$0xff] %v2484
                %v2486 = vld [vmem:[%s2444 + $0xa0] sm:$0xff]
                %2487 = vst [vmem:[%s2445 + $0x120] sm:$0xff] %v2486
                %v2488 = vld [vmem:[%s2444 + $0xa8] sm:$0xff]
                %2489 = vst [vmem:[%s2445 + $0x128] sm:$0xff] %v2488
                %v2490 = vld [vmem:[%s2444 + $0xb0] sm:$0xff]
                %2491 = vst [vmem:[%s2445 + $0x130] sm:$0xff] %v2490
                %v2492 = vld [vmem:[%s2444 + $0xb8] sm:$0xff]
                %2493 = vst [vmem:[%s2445 + $0x138] sm:$0xff] %v2492
                %v2494 = vld [vmem:[%s2444 + $0xc0] sm:$0xff]
                %2495 = vst [vmem:[%s2445 + $0x180] sm:$0xff] %v2494
                %v2496 = vld [vmem:[%s2444 + $0xc8] sm:$0xff]
                %2497 = vst [vmem:[%s2445 + $0x188] sm:$0xff] %v2496
                %v2498 = vld [vmem:[%s2444 + $0xd0] sm:$0xff]
                %2499 = vst [vmem:[%s2445 + $0x190] sm:$0xff] %v2498
                %v2500 = vld [vmem:[%s2444 + $0xd8] sm:$0xff]
                %2501 = vst [vmem:[%s2445 + $0x198] sm:$0xff] %v2500
                %v2502 = vld [vmem:[%s2444 + $0xe0] sm:$0xff]
                %2503 = vst [vmem:[%s2445 + $0x1a0] sm:$0xff] %v2502
                %v2504 = vld [vmem:[%s2444 + $0xe8] sm:$0xff]
                %2505 = vst [vmem:[%s2445 + $0x1a8] sm:$0xff] %v2504
                %v2506 = vld [vmem:[%s2444 + $0xf0] sm:$0xff]
                %2507 = vst [vmem:[%s2445 + $0x1b0] sm:$0xff] %v2506
                %v2508 = vld [vmem:[%s2444 + $0xf8] sm:$0xff]
                %2509 = vst [vmem:[%s2445 + $0x1b8] sm:$0xff] %v2508
                %v2510 = vld [vmem:[%s2444 + $0x100] sm:$0xff]
                %2511 = vst [vmem:[%s2445 + $0x200] sm:$0xff] %v2510
                %v2512 = vld [vmem:[%s2444 + $0x108] sm:$0xff]
                %2513 = vst [vmem:[%s2445 + $0x208] sm:$0xff] %v2512
                %v2514 = vld [vmem:[%s2444 + $0x110] sm:$0xff]
                %2515 = vst [vmem:[%s2445 + $0x210] sm:$0xff] %v2514
                %v2516 = vld [vmem:[%s2444 + $0x118] sm:$0xff]
                %2517 = vst [vmem:[%s2445 + $0x218] sm:$0xff] %v2516
                %v2518 = vld [vmem:[%s2444 + $0x120] sm:$0xff]
                %2519 = vst [vmem:[%s2445 + $0x220] sm:$0xff] %v2518
                %v2520 = vld [vmem:[%s2444 + $0x128] sm:$0xff]
                %2521 = vst [vmem:[%s2445 + $0x228] sm:$0xff] %v2520
                %v2522 = vld [vmem:[%s2444 + $0x130] sm:$0xff]
                %2523 = vst [vmem:[%s2445 + $0x230] sm:$0xff] %v2522
                %v2524 = vld [vmem:[%s2444 + $0x138] sm:$0xff]
                %2525 = vst [vmem:[%s2445 + $0x238] sm:$0xff] %v2524
                %v2526 = vld [vmem:[%s2444 + $0x140] sm:$0xff]
                %2527 = vst [vmem:[%s2445 + $0x280] sm:$0xff] %v2526
                %v2528 = vld [vmem:[%s2444 + $0x148] sm:$0xff]
                %2529 = vst [vmem:[%s2445 + $0x288] sm:$0xff] %v2528
                %v2530 = vld [vmem:[%s2444 + $0x150] sm:$0xff]
                %2531 = vst [vmem:[%s2445 + $0x290] sm:$0xff] %v2530
                %v2532 = vld [vmem:[%s2444 + $0x158] sm:$0xff]
                %2533 = vst [vmem:[%s2445 + $0x298] sm:$0xff] %v2532
                %v2534 = vld [vmem:[%s2444 + $0x160] sm:$0xff]
                %2535 = vst [vmem:[%s2445 + $0x2a0] sm:$0xff] %v2534
                %v2536 = vld [vmem:[%s2444 + $0x168] sm:$0xff]
                %2537 = vst [vmem:[%s2445 + $0x2a8] sm:$0xff] %v2536
                %v2538 = vld [vmem:[%s2444 + $0x170] sm:$0xff]
                %2539 = vst [vmem:[%s2445 + $0x2b0] sm:$0xff] %v2538
                %v2540 = vld [vmem:[%s2444 + $0x178] sm:$0xff]
                %2541 = vst [vmem:[%s2445 + $0x2b8] sm:$0xff] %v2540
                %v2542 = vld [vmem:[%s2444 + $0x180] sm:$0xff]
                %2543 = vst [vmem:[%s2445 + $0x300] sm:$0xff] %v2542
                %v2544 = vld [vmem:[%s2444 + $0x188] sm:$0xff]
                %2545 = vst [vmem:[%s2445 + $0x308] sm:$0xff] %v2544
                %v2546 = vld [vmem:[%s2444 + $0x190] sm:$0xff]
                %2547 = vst [vmem:[%s2445 + $0x310] sm:$0xff] %v2546
                %v2548 = vld [vmem:[%s2444 + $0x198] sm:$0xff]
                %2549 = vst [vmem:[%s2445 + $0x318] sm:$0xff] %v2548
                %v2550 = vld [vmem:[%s2444 + $0x1a0] sm:$0xff]
                %2551 = vst [vmem:[%s2445 + $0x320] sm:$0xff] %v2550
                %v2552 = vld [vmem:[%s2444 + $0x1a8] sm:$0xff]
                %2553 = vst [vmem:[%s2445 + $0x328] sm:$0xff] %v2552
                %v2554 = vld [vmem:[%s2444 + $0x1b0] sm:$0xff]
                %2555 = vst [vmem:[%s2445 + $0x330] sm:$0xff] %v2554
                %v2556 = vld [vmem:[%s2444 + $0x1b8] sm:$0xff]
                %2557 = vst [vmem:[%s2445 + $0x338] sm:$0xff] %v2556
              $region49: #{relu_conv1x1.1} parent=43 // loop_footer
                %s2443 = sadd.s32 1, %s2439
              $region50: #{relu_conv1x1.1} parent=43 // loop_footer_branch
                %2438 = sbr.rel target = $region46
              $region51: #{relu_conv1x1.1} parent=43 // loop_exit
                _
            $region44: #{relu_conv1x1.1} parent=39 // pred_fallthru
              _
            // Predicated region
            $region52: #{relu_conv1x1.1} parent=39 // pred_check
              _
            $region53: #{relu_conv1x1.1} parent=39 // pred_check_branch
              %2559 = sbr.rel target = $region55
            $region54: #{relu_conv1x1.1} parent=39 // pred_region
              _
            $region55: #{relu_conv1x1.1} parent=39 // pred_fallthru
              _
          $region40: #{relu_conv1x1.1} parent=35 // pred_fallthru
            _
          %2560 = vnop
        $region36: #{relu_conv1x1.1} parent=27 // pred_fallthru
          _
      $region28: #{relu_conv1x1.1} parent=5 // pred_fallthru
        _
      %p2561 = scmp.le.s32.totalorder 2, %s11
      // Predicated region
      $region56: #{relu_conv1x1.1} parent=5 // pred_check
        %p2562 = pneg %p2561
      $region57: #{relu_conv1x1.1} parent=5 // pred_check_branch
        %2564 = sbr.rel (%p2562) target = $region59
      $region58: #{relu_conv1x1.1} parent=5 // pred_region
        %s2565 = ssub.s32 %s11, 2
        // Predicated region
        $region60: #{relu_conv1x1.1} parent=58 // pred_check
          %p2566 = pneg %p87
        $region61: #{relu_conv1x1.1} parent=58 // pred_check_branch
          %2568 = sbr.rel (%p2566) target = $region63
        $region62: #{relu_conv1x1.1} parent=58 // pred_region
          %s2569 = sand.u32 %s72, 1
          %s2570 = sand.u32 %s72, 1
          %s2571 = smul.addr %s2570, 448
          %s2572 = scalar_lea.vmem [#allocation4], %s2571
        $region63: #{relu_conv1x1.1} parent=58 // pred_fallthru
          _
      $region59: #{relu_conv1x1.1} parent=5 // pred_fallthru
        _
    $region6: #{relu_conv1x1.1} parent=1 // loop_footer
      %s15 = sadd.s32 1, %s11
    $region7: #{relu_conv1x1.1} parent=1 // loop_footer_branch
      %10 = sbr.rel target = $region3
    $region8: #{relu_conv1x1.1} parent=1 // loop_exit
      _
    %2573 = vsyncpa [#allocation3], 1
    %s2574 = scalar_lea.sflag [#allocation3], 1
    %2575 = vsyncpa %s2574, 1

</llo_original>
